<compile_context>
chip_gen: v6e
topology: v6e:2x2x1
jax: 0.10.0
libtpu: 0.0.40
codegen_flags: <defaults>
</compile_context>

<pallas_src>
import jax
import jax.numpy as jnp
from jax.experimental import pallas as pl
from jax.experimental.pallas import tpu as pltpu


_PARAMS_PER_BLOCK = 4  # stacked order per block: we1, we2, wcd1(=wc@wd1), wd2 (+ matching biases)


# ---------------------------------------------------------------------------
# Fused Pallas kernel: all layers + head in one body, everything VMEM-resident
# ---------------------------------------------------------------------------
def _make_fused_kernel(n_layers):

    def kernel(x_ref, inc_ref, inct_ref, w_ref, b_ref, wlin_ref, blin_ref, out_ref):
        f32 = jnp.float32
        bf16 = jnp.bfloat16
        inc = inc_ref[...]        # (N, E) bf16 (0/1 -> exact)
        inc_t = inct_ref[...]     # (E, N) bf16, precomputed in the wrapper
        num_nodes, num_edges = inc.shape

        def block(x, mat, blk, inc_first):
            """One AllSetBlock. `mat` is the already-oriented incidence operator (bf16)."""
            k = _PARAMS_PER_BLOCK * blk
            we1, we2, wcd1, wd2 = w_ref[k], w_ref[k + 1], w_ref[k + 2], w_ref[k + 3]
            be1, be2, bd1, bd2 = b_ref[k], b_ref[k + 1], b_ref[k + 2], b_ref[k + 3]
            # encoder MLP: Linear -> ReLU -> (Dropout=id) -> Linear, then block ReLU
            h = jnp.maximum(jnp.dot(x, we1, preferred_element_type=f32) + be1, 0.0)
            h = jnp.maximum(jnp.dot(h, we2, preferred_element_type=f32) + be2, 0.0)
            # Conv + decoder Linear-1 folded: mat @ (h @ (wc @ wd1)) + bd1.
            # Aggregation matmul runs with bf16 operands (incidence exact in bf16),
            # f32 accumulation. Static contraction-order choice: apply the (hid,hid)
            # matmul to the smaller row count.
            if inc_first:
                agg = jnp.dot(mat, h.astype(bf16), preferred_element_type=f32)
                d = jnp.dot(agg, wcd1, preferred_element_type=f32) + bd1
            else:
                msg = jnp.dot(h, wcd1, preferred_element_type=f32)
                d = jnp.dot(mat, msg.astype(bf16), preferred_element_type=f32) + bd1
            d = jnp.maximum(d, 0.0)
            # decoder Linear-2, then block-level ReLU
            d = jnp.dot(d, wd2, preferred_element_type=f32) + bd2
            return jnp.maximum(d, 0.0)

        x = x_ref[...]
        for li in range(n_layers):
            # vertex2edge: output rows = num_edges, input rows = num_nodes
            x1 = block(x, inc_t, 2 * li, inc_first=(num_edges <= num_nodes))
            # edge2vertex: output rows = num_nodes, input rows = num_edges
            x = block(x1, inc, 2 * li + 1, inc_first=(num_nodes <= num_edges))

        # head: max-pool over nodes -> Linear -> sigmoid (only HBM-visible output)
        pooled = jnp.max(x, axis=0, keepdims=True)                              # (1, hid)
        logits = jnp.dot(pooled, wlin_ref[...],
                         preferred_element_type=f32) + blin_ref[...]            # (1, out_ch)
        out_ref[...] = jax.nn.sigmoid(logits)

    return kernel


def allset_forward(x0, incidence, w_stack, b_stack, w_lin, b_lin):
    """Fully fused AllSet forward. Returns sigmoid(linear(maxpool(x)))[0] as a scalar."""
    n_blocks = w_stack.shape[0] // _PARAMS_PER_BLOCK
    n_layers = n_blocks // 2
    num_nodes, num_edges = incidence.shape
    hid = w_stack.shape[-1]
    out_ch = w_lin.shape[1]

    inc_bf = incidence.astype(jnp.bfloat16)   # 0/1 incidence is exact in bf16
    inc_t_bf = inc_bf.T                       # precomputed once, outside the kernel

    args = (x0.astype(jnp.float32), inc_bf, inc_t_bf, w_stack, b_stack, w_lin, b_lin)

    # Advisory cost estimate for XLA scheduling around the custom call.
    nbytes = sum(int(a.size) * a.dtype.itemsize for a in args) + out_ch * 4
    flops = 0
    for _ in range(n_layers):
        for rows_in, rows_out in ((num_nodes, num_edges), (num_edges, num_nodes)):
            flops += 2 * 2 * rows_in * hid * hid                 # encoder MLP (2 matmuls)
            flops += 2 * num_nodes * num_edges * hid             # incidence aggregation
            flops += 2 * min(rows_in, rows_out) * hid * hid      # folded conv + decoder Linear-1
            flops += 2 * rows_out * hid * hid                    # decoder Linear-2
    flops += 2 * hid * out_ch                                    # head

    vmem_spec = pl.BlockSpec(memory_space=pltpu.MemorySpace.VMEM)
    probs = pl.pallas_call(
        _make_fused_kernel(n_layers),
        in_specs=[vmem_spec] * len(args),
        out_specs=vmem_spec,
        out_shape=jax.ShapeDtypeStruct((1, out_ch), jnp.float32),
        compiler_params=pltpu.CompilerParams(vmem_limit_bytes=32 * 1024 * 1024),
        cost_estimate=pl.CostEstimate(flops=flops, transcendentals=out_ch,
                                      bytes_accessed=nbytes),
    )(*args)
    return probs[0, 0]  # matches `...[0]` in the reference module


# ---------------------------------------------------------------------------
# Deterministic parameter initialization (synthetic; mirrors torch shapes)
# ---------------------------------------------------------------------------
def _linear_params(key, fan_in, fan_out):
    # torch.nn.Linear default init U(-1/sqrt(fan_in), 1/sqrt(fan_in)).
    # Weight stored pre-transposed as (fan_in, fan_out); bias as (1, fan_out).
    kw, kb = jax.random.split(key)
    bound = 1.0 / (fan_in ** 0.5)
    w = jax.random.uniform(kw, (fan_in, fan_out), jnp.float32, -bound, bound)
    b = jax.random.uniform(kb, (1, fan_out), jnp.float32, -bound, bound)
    return w, b


def init_allset_block(key, in_ch, hid):
    k = jax.random.split(key, 5)
    we1, be1 = _linear_params(k[0], in_ch, hid)   # encoder Linear 1
    we2, be2 = _linear_params(k[1], hid, hid)     # encoder Linear 2
    wd1, bd1 = _linear_params(k[2], hid, hid)     # decoder Linear 1
    wd2, bd2 = _linear_params(k[3], hid, hid)     # decoder Linear 2
    # Conv weight (in_channels becomes hid when mlp_num_layers > 0): xavier_uniform bound
    bound = (6.0 / (hid + hid)) ** 0.5
    wc = jax.random.uniform(k[4], (hid, hid), jnp.float32, -bound, bound)
    return dict(we1=we1, be1=be1, we2=we2, be2=be2, wc=wc,
                wd1=wd1, bd1=bd1, wd2=wd2, bd2=bd2)


def init_allset(key, in_ch, hid, out_ch, n_layers=2):
    # NOTE: the reference module constructs *every* layer with in_channels=in_channels,
    # so a valid run requires in_ch == hid (uniform stacking relies on this too).
    assert in_ch == hid, "reference module requires in_channels == hidden_channels"
    keys = jax.random.split(key, 2 * n_layers + 1)
    blocks = []
    for i in range(n_layers):
        blocks.append(init_allset_block(keys[2 * i], in_ch, hid))     # vertex2edge block
        blocks.append(init_allset_block(keys[2 * i + 1], hid, hid))   # edge2vertex block
    w_lin, b_lin = _linear_params(keys[-1], hid, out_ch)

    # Pack per-block parameters into two lane-dense stacks (one DMA each), folding
    # the Conv weight with decoder Linear-1 (no nonlinearity in between).
    w_list, b_list = [], []
    for p in blocks:
        wcd1 = jnp.dot(p["wc"], p["wd1"])
        w_list += [p["we1"], p["we2"], wcd1, p["wd2"]]
        b_list += [p["be1"], p["be2"], p["bd1"], p["bd2"]]
    w_stack = jnp.stack(w_list)   # (4*n_blocks, hid, hid)
    b_stack = jnp.stack(b_list)   # (4*n_blocks, 1, hid)
    return blocks, w_stack, b_stack, w_lin, b_lin


# ---------------------------------------------------------------------------
# Pure-JAX reference (unfolded weights, f32) for a correctness check
# ---------------------------------------------------------------------------
def _block_ref(x, inc, p):
    h = jnp.maximum(x @ p["we1"] + p["be1"], 0.0)
    h = jnp.maximum(h @ p["we2"] + p["be2"], 0.0)
    y = inc @ (h @ p["wc"])
    d = jnp.maximum(y @ p["wd1"] + p["bd1"], 0.0)
    return jnp.maximum(d @ p["wd2"] + p["bd2"], 0.0)


def _forward_ref(x0, incidence, blocks, w_lin, b_lin):
    inc_t = incidence.T
    for li in range(len(blocks) // 2):
        x1 = _block_ref(x0, inc_t, blocks[2 * li])
        x0 = _block_ref(x1, incidence, blocks[2 * li + 1])
    pooled = jnp.max(x0, axis=0, keepdims=True)
    return jax.nn.sigmoid(pooled @ w_lin + b_lin)[0, 0]


if __name__ == "__main__":
    key = jax.random.PRNGKey(0)
    num_nodes, num_edges = 64, 32
    in_ch = hid = 32      # in_channels must equal hidden_channels for the reference module to run
    out_ch = 8
    n_layers = 2

    kx, ki, kp = jax.random.split(key, 3)
    x_0 = jax.random.normal(kx, (num_nodes, in_ch), jnp.float32)
    incidence_1 = (jax.random.uniform(ki, (num_nodes, num_edges)) < 0.3).astype(jnp.float32)

    blocks, w_stack, b_stack, w_lin, b_lin = init_allset(kp, in_ch, hid, out_ch, n_layers)

    out = allset_forward(x_0, incidence_1, w_stack, b_stack, w_lin, b_lin)
    out = jax.block_until_ready(out)

    with jax.default_matmul_precision("highest"):
        ref = jax.block_until_ready(_forward_ref(x_0, incidence_1, blocks, w_lin, b_lin))

    assert jnp.isfinite(out), "non-finite output"
    # Tolerance covers the wcd1 = wc @ wd1 fold and bf16 operands on the aggregation
    # matmuls (incidence is exact in bf16; all accumulation stays f32).
    assert abs(float(out) - float(ref)) < 2e-2, (float(out), float(ref))
    print("KERNEL_OK")
</pallas_src>

<mosaic_0001>
module attributes {stable_mosaic.version = 11 : i64} {
  func.func @kernel(%arg0: memref<64x32xf32, #tpu.memory_space<vmem>>, %arg1: memref<64x32xbf16, #tpu.memory_space<vmem>>, %arg2: memref<32x64xbf16, #tpu.memory_space<vmem>>, %arg3: memref<16x32x32xf32, #tpu.memory_space<vmem>>, %arg4: memref<16x1x32xf32, #tpu.memory_space<vmem>>, %arg5: memref<32x8xf32, #tpu.memory_space<vmem>>, %arg6: memref<1x8xf32, #tpu.memory_space<vmem>>, %arg7: memref<1x8xf32, #tpu.memory_space<vmem>>) attributes {dimension_semantics = [], scalar_prefetch = 0 : i64, scratch_operands = 0 : i64, tpu.core_type = #tpu.core_type<tc>} {
    %c0 = arith.constant 0 : index
    %c0_0 = arith.constant 0 : index
    %0 = vector.load %arg1[%c0, %c0_0] : memref<64x32xbf16, #tpu.memory_space<vmem>>, vector<64x32xbf16>
    %c0_1 = arith.constant 0 : index
    %c0_2 = arith.constant 0 : index
    %1 = vector.load %arg2[%c0_1, %c0_2] : memref<32x64xbf16, #tpu.memory_space<vmem>>, vector<32x64xbf16>
    %c0_3 = arith.constant 0 : index
    %c0_4 = arith.constant 0 : index
    %2 = vector.load %arg0[%c0_3, %c0_4] : memref<64x32xf32, #tpu.memory_space<vmem>>, vector<64x32xf32>
    %c0_5 = arith.constant 0 : index
    %c0_6 = arith.constant 0 : index
    %c0_7 = arith.constant 0 : index
    %3 = vector.load %arg3[%c0_5, %c0_6, %c0_7] : memref<16x32x32xf32, #tpu.memory_space<vmem>>, vector<1x32x32xf32>
    %4 = vector.shape_cast %3 : vector<1x32x32xf32> to vector<32x32xf32>
    %c1 = arith.constant 1 : index
    %c0_8 = arith.constant 0 : index
    %c0_9 = arith.constant 0 : index
    %5 = vector.load %arg3[%c1, %c0_8, %c0_9] : memref<16x32x32xf32, #tpu.memory_space<vmem>>, vector<1x32x32xf32>
    %6 = vector.shape_cast %5 : vector<1x32x32xf32> to vector<32x32xf32>
    %c2 = arith.constant 2 : index
    %c0_10 = arith.constant 0 : index
    %c0_11 = arith.constant 0 : index
    %7 = vector.load %arg3[%c2, %c0_10, %c0_11] : memref<16x32x32xf32, #tpu.memory_space<vmem>>, vector<1x32x32xf32>
    %8 = vector.shape_cast %7 : vector<1x32x32xf32> to vector<32x32xf32>
    %c3 = arith.constant 3 : index
    %c0_12 = arith.constant 0 : index
    %c0_13 = arith.constant 0 : index
    %9 = vector.load %arg3[%c3, %c0_12, %c0_13] : memref<16x32x32xf32, #tpu.memory_space<vmem>>, vector<1x32x32xf32>
    %10 = vector.shape_cast %9 : vector<1x32x32xf32> to vector<32x32xf32>
    %c0_14 = arith.constant 0 : index
    %c0_15 = arith.constant 0 : index
    %c0_16 = arith.constant 0 : index
    %11 = vector.load %arg4[%c0_14, %c0_15, %c0_16] : memref<16x1x32xf32, #tpu.memory_space<vmem>>, vector<1x1x32xf32>
    %12 = vector.shape_cast %11 : vector<1x1x32xf32> to vector<1x32xf32>
    %c1_17 = arith.constant 1 : index
    %c0_18 = arith.constant 0 : index
    %c0_19 = arith.constant 0 : index
    %13 = vector.load %arg4[%c1_17, %c0_18, %c0_19] : memref<16x1x32xf32, #tpu.memory_space<vmem>>, vector<1x1x32xf32>
    %14 = vector.shape_cast %13 : vector<1x1x32xf32> to vector<1x32xf32>
    %c2_20 = arith.constant 2 : index
    %c0_21 = arith.constant 0 : index
    %c0_22 = arith.constant 0 : index
    %15 = vector.load %arg4[%c2_20, %c0_21, %c0_22] : memref<16x1x32xf32, #tpu.memory_space<vmem>>, vector<1x1x32xf32>
    %16 = vector.shape_cast %15 : vector<1x1x32xf32> to vector<1x32xf32>
    %c3_23 = arith.constant 3 : index
    %c0_24 = arith.constant 0 : index
    %c0_25 = arith.constant 0 : index
    %17 = vector.load %arg4[%c3_23, %c0_24, %c0_25] : memref<16x1x32xf32, #tpu.memory_space<vmem>>, vector<1x1x32xf32>
    %18 = vector.shape_cast %17 : vector<1x1x32xf32> to vector<1x32xf32>
    %cst = arith.constant dense<0.000000e+00> : vector<64x32xf32>
    %19 = tpu.matmul %2, %4, %cst {dimension_numbers = #tpu.dot_dimension_numbers<[1], [0], [0], [1], [0, 0, 1, 1], [], []>} : vector<64x32xf32>, vector<32x32xf32>, vector<64x32xf32> -> vector<64x32xf32>
    %20 = vector.broadcast %12 : vector<1x32xf32> to vector<64x32xf32>
    %21 = arith.addf %19, %20 : vector<64x32xf32>
    %cst_26 = arith.constant 0.000000e+00 : f32
    %22 = vector.broadcast %cst_26 : f32 to vector<64x32xf32>
    %23 = arith.maximumf %21, %22 : vector<64x32xf32>
    %cst_27 = arith.constant dense<0.000000e+00> : vector<64x32xf32>
    %24 = tpu.matmul %23, %6, %cst_27 {dimension_numbers = #tpu.dot_dimension_numbers<[1], [0], [0], [1], [0, 0, 1, 1], [], []>} : vector<64x32xf32>, vector<32x32xf32>, vector<64x32xf32> -> vector<64x32xf32>
    %25 = vector.broadcast %14 : vector<1x32xf32> to vector<64x32xf32>
    %26 = arith.addf %24, %25 : vector<64x32xf32>
    %cst_28 = arith.constant 0.000000e+00 : f32
    %27 = vector.broadcast %cst_28 : f32 to vector<64x32xf32>
    %28 = arith.maximumf %26, %27 : vector<64x32xf32>
    %29 = arith.truncf %28 : vector<64x32xf32> to vector<64x32xbf16>
    %cst_29 = arith.constant dense<0.000000e+00> : vector<32x32xf32>
    %30 = tpu.matmul %1, %29, %cst_29 {dimension_numbers = #tpu.dot_dimension_numbers<[1], [0], [0], [1], [0, 0, 1, 1], [], []>} : vector<32x64xbf16>, vector<64x32xbf16>, vector<32x32xf32> -> vector<32x32xf32>
    %cst_30 = arith.constant dense<0.000000e+00> : vector<32x32xf32>
    %31 = tpu.matmul %30, %8, %cst_30 {dimension_numbers = #tpu.dot_dimension_numbers<[1], [0], [0], [1], [0, 0, 1, 1], [], []>} : vector<32x32xf32>, vector<32x32xf32>, vector<32x32xf32> -> vector<32x32xf32>
    %32 = vector.broadcast %16 : vector<1x32xf32> to vector<32x32xf32>
    %33 = arith.addf %31, %32 : vector<32x32xf32>
    %cst_31 = arith.constant 0.000000e+00 : f32
    %34 = vector.broadcast %cst_31 : f32 to vector<32x32xf32>
    %35 = arith.maximumf %33, %34 : vector<32x32xf32>
    %cst_32 = arith.constant dense<0.000000e+00> : vector<32x32xf32>
    %36 = tpu.matmul %35, %10, %cst_32 {dimension_numbers = #tpu.dot_dimension_numbers<[1], [0], [0], [1], [0, 0, 1, 1], [], []>} : vector<32x32xf32>, vector<32x32xf32>, vector<32x32xf32> -> vector<32x32xf32>
    %37 = vector.broadcast %18 : vector<1x32xf32> to vector<32x32xf32>
    %38 = arith.addf %36, %37 : vector<32x32xf32>
    %cst_33 = arith.constant 0.000000e+00 : f32
    %39 = vector.broadcast %cst_33 : f32 to vector<32x32xf32>
    %40 = arith.maximumf %38, %39 : vector<32x32xf32>
    %c4 = arith.constant 4 : index
    %c0_34 = arith.constant 0 : index
    %c0_35 = arith.constant 0 : index
    %41 = vector.load %arg3[%c4, %c0_34, %c0_35] : memref<16x32x32xf32, #tpu.memory_space<vmem>>, vector<1x32x32xf32>
    %42 = vector.shape_cast %41 : vector<1x32x32xf32> to vector<32x32xf32>
    %c5 = arith.constant 5 : index
    %c0_36 = arith.constant 0 : index
    %c0_37 = arith.constant 0 : index
    %43 = vector.load %arg3[%c5, %c0_36, %c0_37] : memref<16x32x32xf32, #tpu.memory_space<vmem>>, vector<1x32x32xf32>
    %44 = vector.shape_cast %43 : vector<1x32x32xf32> to vector<32x32xf32>
    %c6 = arith.constant 6 : index
    %c0_38 = arith.constant 0 : index
    %c0_39 = arith.constant 0 : index
    %45 = vector.load %arg3[%c6, %c0_38, %c0_39] : memref<16x32x32xf32, #tpu.memory_space<vmem>>, vector<1x32x32xf32>
    %46 = vector.shape_cast %45 : vector<1x32x32xf32> to vector<32x32xf32>
    %c7 = arith.constant 7 : index
    %c0_40 = arith.constant 0 : index
    %c0_41 = arith.constant 0 : index
    %47 = vector.load %arg3[%c7, %c0_40, %c0_41] : memref<16x32x32xf32, #tpu.memory_space<vmem>>, vector<1x32x32xf32>
    %48 = vector.shape_cast %47 : vector<1x32x32xf32> to vector<32x32xf32>
    %c4_42 = arith.constant 4 : index
    %c0_43 = arith.constant 0 : index
    %c0_44 = arith.constant 0 : index
    %49 = vector.load %arg4[%c4_42, %c0_43, %c0_44] : memref<16x1x32xf32, #tpu.memory_space<vmem>>, vector<1x1x32xf32>
    %50 = vector.shape_cast %49 : vector<1x1x32xf32> to vector<1x32xf32>
    %c5_45 = arith.constant 5 : index
    %c0_46 = arith.constant 0 : index
    %c0_47 = arith.constant 0 : index
    %51 = vector.load %arg4[%c5_45, %c0_46, %c0_47] : memref<16x1x32xf32, #tpu.memory_space<vmem>>, vector<1x1x32xf32>
    %52 = vector.shape_cast %51 : vector<1x1x32xf32> to vector<1x32xf32>
    %c6_48 = arith.constant 6 : index
    %c0_49 = arith.constant 0 : index
    %c0_50 = arith.constant 0 : index
    %53 = vector.load %arg4[%c6_48, %c0_49, %c0_50] : memref<16x1x32xf32, #tpu.memory_space<vmem>>, vector<1x1x32xf32>
    %54 = vector.shape_cast %53 : vector<1x1x32xf32> to vector<1x32xf32>
    %c7_51 = arith.constant 7 : index
    %c0_52 = arith.constant 0 : index
    %c0_53 = arith.constant 0 : index
    %55 = vector.load %arg4[%c7_51, %c0_52, %c0_53] : memref<16x1x32xf32, #tpu.memory_space<vmem>>, vector<1x1x32xf32>
    %56 = vector.shape_cast %55 : vector<1x1x32xf32> to vector<1x32xf32>
    %cst_54 = arith.constant dense<0.000000e+00> : vector<32x32xf32>
    %57 = tpu.matmul %40, %42, %cst_54 {dimension_numbers = #tpu.dot_dimension_numbers<[1], [0], [0], [1], [0, 0, 1, 1], [], []>} : vector<32x32xf32>, vector<32x32xf32>, vector<32x32xf32> -> vector<32x32xf32>
    %58 = vector.broadcast %50 : vector<1x32xf32> to vector<32x32xf32>
    %59 = arith.addf %57, %58 : vector<32x32xf32>
    %cst_55 = arith.constant 0.000000e+00 : f32
    %60 = vector.broadcast %cst_55 : f32 to vector<32x32xf32>
    %61 = arith.maximumf %59, %60 : vector<32x32xf32>
    %cst_56 = arith.constant dense<0.000000e+00> : vector<32x32xf32>
    %62 = tpu.matmul %61, %44, %cst_56 {dimension_numbers = #tpu.dot_dimension_numbers<[1], [0], [0], [1], [0, 0, 1, 1], [], []>} : vector<32x32xf32>, vector<32x32xf32>, vector<32x32xf32> -> vector<32x32xf32>
    %63 = vector.broadcast %52 : vector<1x32xf32> to vector<32x32xf32>
    %64 = arith.addf %62, %63 : vector<32x32xf32>
    %cst_57 = arith.constant 0.000000e+00 : f32
    %65 = vector.broadcast %cst_57 : f32 to vector<32x32xf32>
    %66 = arith.maximumf %64, %65 : vector<32x32xf32>
    %cst_58 = arith.constant dense<0.000000e+00> : vector<32x32xf32>
    %67 = tpu.matmul %66, %46, %cst_58 {dimension_numbers = #tpu.dot_dimension_numbers<[1], [0], [0], [1], [0, 0, 1, 1], [], []>} : vector<32x32xf32>, vector<32x32xf32>, vector<32x32xf32> -> vector<32x32xf32>
    %68 = arith.truncf %67 : vector<32x32xf32> to vector<32x32xbf16>
    %cst_59 = arith.constant dense<0.000000e+00> : vector<64x32xf32>
    %69 = tpu.matmul %0, %68, %cst_59 {dimension_numbers = #tpu.dot_dimension_numbers<[1], [0], [0], [1], [0, 0, 1, 1], [], []>} : vector<64x32xbf16>, vector<32x32xbf16>, vector<64x32xf32> -> vector<64x32xf32>
    %70 = vector.broadcast %54 : vector<1x32xf32> to vector<64x32xf32>
    %71 = arith.addf %69, %70 : vector<64x32xf32>
    %cst_60 = arith.constant 0.000000e+00 : f32
    %72 = vector.broadcast %cst_60 : f32 to vector<64x32xf32>
    %73 = arith.maximumf %71, %72 : vector<64x32xf32>
    %cst_61 = arith.constant dense<0.000000e+00> : vector<64x32xf32>
    %74 = tpu.matmul %73, %48, %cst_61 {dimension_numbers = #tpu.dot_dimension_numbers<[1], [0], [0], [1], [0, 0, 1, 1], [], []>} : vector<64x32xf32>, vector<32x32xf32>, vector<64x32xf32> -> vector<64x32xf32>
    %75 = vector.broadcast %56 : vector<1x32xf32> to vector<64x32xf32>
    %76 = arith.addf %74, %75 : vector<64x32xf32>
    %cst_62 = arith.constant 0.000000e+00 : f32
    %77 = vector.broadcast %cst_62 : f32 to vector<64x32xf32>
    %78 = arith.maximumf %76, %77 : vector<64x32xf32>
    %c8 = arith.constant 8 : index
    %c0_63 = arith.constant 0 : index
    %c0_64 = arith.constant 0 : index
    %79 = vector.load %arg3[%c8, %c0_63, %c0_64] : memref<16x32x32xf32, #tpu.memory_space<vmem>>, vector<1x32x32xf32>
    %80 = vector.shape_cast %79 : vector<1x32x32xf32> to vector<32x32xf32>
    %c9 = arith.constant 9 : index
    %c0_65 = arith.constant 0 : index
    %c0_66 = arith.constant 0 : index
    %81 = vector.load %arg3[%c9, %c0_65, %c0_66] : memref<16x32x32xf32, #tpu.memory_space<vmem>>, vector<1x32x32xf32>
    %82 = vector.shape_cast %81 : vector<1x32x32xf32> to vector<32x32xf32>
    %c10 = arith.constant 10 : index
    %c0_67 = arith.constant 0 : index
    %c0_68 = arith.constant 0 : index
    %83 = vector.load %arg3[%c10, %c0_67, %c0_68] : memref<16x32x32xf32, #tpu.memory_space<vmem>>, vector<1x32x32xf32>
    %84 = vector.shape_cast %83 : vector<1x32x32xf32> to vector<32x32xf32>
    %c11 = arith.constant 11 : index
    %c0_69 = arith.constant 0 : index
    %c0_70 = arith.constant 0 : index
    %85 = vector.load %arg3[%c11, %c0_69, %c0_70] : memref<16x32x32xf32, #tpu.memory_space<vmem>>, vector<1x32x32xf32>
    %86 = vector.shape_cast %85 : vector<1x32x32xf32> to vector<32x32xf32>
    %c8_71 = arith.constant 8 : index
    %c0_72 = arith.constant 0 : index
    %c0_73 = arith.constant 0 : index
    %87 = vector.load %arg4[%c8_71, %c0_72, %c0_73] : memref<16x1x32xf32, #tpu.memory_space<vmem>>, vector<1x1x32xf32>
    %88 = vector.shape_cast %87 : vector<1x1x32xf32> to vector<1x32xf32>
    %c9_74 = arith.constant 9 : index
    %c0_75 = arith.constant 0 : index
    %c0_76 = arith.constant 0 : index
    %89 = vector.load %arg4[%c9_74, %c0_75, %c0_76] : memref<16x1x32xf32, #tpu.memory_space<vmem>>, vector<1x1x32xf32>
    %90 = vector.shape_cast %89 : vector<1x1x32xf32> to vector<1x32xf32>
    %c10_77 = arith.constant 10 : index
    %c0_78 = arith.constant 0 : index
    %c0_79 = arith.constant 0 : index
    %91 = vector.load %arg4[%c10_77, %c0_78, %c0_79] : memref<16x1x32xf32, #tpu.memory_space<vmem>>, vector<1x1x32xf32>
    %92 = vector.shape_cast %91 : vector<1x1x32xf32> to vector<1x32xf32>
    %c11_80 = arith.constant 11 : index
    %c0_81 = arith.constant 0 : index
    %c0_82 = arith.constant 0 : index
    %93 = vector.load %arg4[%c11_80, %c0_81, %c0_82] : memref<16x1x32xf32, #tpu.memory_space<vmem>>, vector<1x1x32xf32>
    %94 = vector.shape_cast %93 : vector<1x1x32xf32> to vector<1x32xf32>
    %cst_83 = arith.constant dense<0.000000e+00> : vector<64x32xf32>
    %95 = tpu.matmul %78, %80, %cst_83 {dimension_numbers = #tpu.dot_dimension_numbers<[1], [0], [0], [1], [0, 0, 1, 1], [], []>} : vector<64x32xf32>, vector<32x32xf32>, vector<64x32xf32> -> vector<64x32xf32>
    %96 = vector.broadcast %88 : vector<1x32xf32> to vector<64x32xf32>
    %97 = arith.addf %95, %96 : vector<64x32xf32>
    %cst_84 = arith.constant 0.000000e+00 : f32
    %98 = vector.broadcast %cst_84 : f32 to vector<64x32xf32>
    %99 = arith.maximumf %97, %98 : vector<64x32xf32>
    %cst_85 = arith.constant dense<0.000000e+00> : vector<64x32xf32>
    %100 = tpu.matmul %99, %82, %cst_85 {dimension_numbers = #tpu.dot_dimension_numbers<[1], [0], [0], [1], [0, 0, 1, 1], [], []>} : vector<64x32xf32>, vector<32x32xf32>, vector<64x32xf32> -> vector<64x32xf32>
    %101 = vector.broadcast %90 : vector<1x32xf32> to vector<64x32xf32>
    %102 = arith.addf %100, %101 : vector<64x32xf32>
    %cst_86 = arith.constant 0.000000e+00 : f32
    %103 = vector.broadcast %cst_86 : f32 to vector<64x32xf32>
    %104 = arith.maximumf %102, %103 : vector<64x32xf32>
    %105 = arith.truncf %104 : vector<64x32xf32> to vector<64x32xbf16>
    %cst_87 = arith.constant dense<0.000000e+00> : vector<32x32xf32>
    %106 = tpu.matmul %1, %105, %cst_87 {dimension_numbers = #tpu.dot_dimension_numbers<[1], [0], [0], [1], [0, 0, 1, 1], [], []>} : vector<32x64xbf16>, vector<64x32xbf16>, vector<32x32xf32> -> vector<32x32xf32>
    %cst_88 = arith.constant dense<0.000000e+00> : vector<32x32xf32>
    %107 = tpu.matmul %106, %84, %cst_88 {dimension_numbers = #tpu.dot_dimension_numbers<[1], [0], [0], [1], [0, 0, 1, 1], [], []>} : vector<32x32xf32>, vector<32x32xf32>, vector<32x32xf32> -> vector<32x32xf32>
    %108 = vector.broadcast %92 : vector<1x32xf32> to vector<32x32xf32>
    %109 = arith.addf %107, %108 : vector<32x32xf32>
    %cst_89 = arith.constant 0.000000e+00 : f32
    %110 = vector.broadcast %cst_89 : f32 to vector<32x32xf32>
    %111 = arith.maximumf %109, %110 : vector<32x32xf32>
    %cst_90 = arith.constant dense<0.000000e+00> : vector<32x32xf32>
    %112 = tpu.matmul %111, %86, %cst_90 {dimension_numbers = #tpu.dot_dimension_numbers<[1], [0], [0], [1], [0, 0, 1, 1], [], []>} : vector<32x32xf32>, vector<32x32xf32>, vector<32x32xf32> -> vector<32x32xf32>
    %113 = vector.broadcast %94 : vector<1x32xf32> to vector<32x32xf32>
    %114 = arith.addf %112, %113 : vector<32x32xf32>
    %cst_91 = arith.constant 0.000000e+00 : f32
    %115 = vector.broadcast %cst_91 : f32 to vector<32x32xf32>
    %116 = arith.maximumf %114, %115 : vector<32x32xf32>
    %c12 = arith.constant 12 : index
    %c0_92 = arith.constant 0 : index
    %c0_93 = arith.constant 0 : index
    %117 = vector.load %arg3[%c12, %c0_92, %c0_93] : memref<16x32x32xf32, #tpu.memory_space<vmem>>, vector<1x32x32xf32>
    %118 = vector.shape_cast %117 : vector<1x32x32xf32> to vector<32x32xf32>
    %c13 = arith.constant 13 : index
    %c0_94 = arith.constant 0 : index
    %c0_95 = arith.constant 0 : index
    %119 = vector.load %arg3[%c13, %c0_94, %c0_95] : memref<16x32x32xf32, #tpu.memory_space<vmem>>, vector<1x32x32xf32>
    %120 = vector.shape_cast %119 : vector<1x32x32xf32> to vector<32x32xf32>
    %c14 = arith.constant 14 : index
    %c0_96 = arith.constant 0 : index
    %c0_97 = arith.constant 0 : index
    %121 = vector.load %arg3[%c14, %c0_96, %c0_97] : memref<16x32x32xf32, #tpu.memory_space<vmem>>, vector<1x32x32xf32>
    %122 = vector.shape_cast %121 : vector<1x32x32xf32> to vector<32x32xf32>
    %c15 = arith.constant 15 : index
    %c0_98 = arith.constant 0 : index
    %c0_99 = arith.constant 0 : index
    %123 = vector.load %arg3[%c15, %c0_98, %c0_99] : memref<16x32x32xf32, #tpu.memory_space<vmem>>, vector<1x32x32xf32>
    %124 = vector.shape_cast %123 : vector<1x32x32xf32> to vector<32x32xf32>
    %c12_100 = arith.constant 12 : index
    %c0_101 = arith.constant 0 : index
    %c0_102 = arith.constant 0 : index
    %125 = vector.load %arg4[%c12_100, %c0_101, %c0_102] : memref<16x1x32xf32, #tpu.memory_space<vmem>>, vector<1x1x32xf32>
    %126 = vector.shape_cast %125 : vector<1x1x32xf32> to vector<1x32xf32>
    %c13_103 = arith.constant 13 : index
    %c0_104 = arith.constant 0 : index
    %c0_105 = arith.constant 0 : index
    %127 = vector.load %arg4[%c13_103, %c0_104, %c0_105] : memref<16x1x32xf32, #tpu.memory_space<vmem>>, vector<1x1x32xf32>
    %128 = vector.shape_cast %127 : vector<1x1x32xf32> to vector<1x32xf32>
    %c14_106 = arith.constant 14 : index
    %c0_107 = arith.constant 0 : index
    %c0_108 = arith.constant 0 : index
    %129 = vector.load %arg4[%c14_106, %c0_107, %c0_108] : memref<16x1x32xf32, #tpu.memory_space<vmem>>, vector<1x1x32xf32>
    %130 = vector.shape_cast %129 : vector<1x1x32xf32> to vector<1x32xf32>
    %c15_109 = arith.constant 15 : index
    %c0_110 = arith.constant 0 : index
    %c0_111 = arith.constant 0 : index
    %131 = vector.load %arg4[%c15_109, %c0_110, %c0_111] : memref<16x1x32xf32, #tpu.memory_space<vmem>>, vector<1x1x32xf32>
    %132 = vector.shape_cast %131 : vector<1x1x32xf32> to vector<1x32xf32>
    %cst_112 = arith.constant dense<0.000000e+00> : vector<32x32xf32>
    %133 = tpu.matmul %116, %118, %cst_112 {dimension_numbers = #tpu.dot_dimension_numbers<[1], [0], [0], [1], [0, 0, 1, 1], [], []>} : vector<32x32xf32>, vector<32x32xf32>, vector<32x32xf32> -> vector<32x32xf32>
    %134 = vector.broadcast %126 : vector<1x32xf32> to vector<32x32xf32>
    %135 = arith.addf %133, %134 : vector<32x32xf32>
    %cst_113 = arith.constant 0.000000e+00 : f32
    %136 = vector.broadcast %cst_113 : f32 to vector<32x32xf32>
    %137 = arith.maximumf %135, %136 : vector<32x32xf32>
    %cst_114 = arith.constant dense<0.000000e+00> : vector<32x32xf32>
    %138 = tpu.matmul %137, %120, %cst_114 {dimension_numbers = #tpu.dot_dimension_numbers<[1], [0], [0], [1], [0, 0, 1, 1], [], []>} : vector<32x32xf32>, vector<32x32xf32>, vector<32x32xf32> -> vector<32x32xf32>
    %139 = vector.broadcast %128 : vector<1x32xf32> to vector<32x32xf32>
    %140 = arith.addf %138, %139 : vector<32x32xf32>
    %cst_115 = arith.constant 0.000000e+00 : f32
    %141 = vector.broadcast %cst_115 : f32 to vector<32x32xf32>
    %142 = arith.maximumf %140, %141 : vector<32x32xf32>
    %cst_116 = arith.constant dense<0.000000e+00> : vector<32x32xf32>
    %143 = tpu.matmul %142, %122, %cst_116 {dimension_numbers = #tpu.dot_dimension_numbers<[1], [0], [0], [1], [0, 0, 1, 1], [], []>} : vector<32x32xf32>, vector<32x32xf32>, vector<32x32xf32> -> vector<32x32xf32>
    %144 = arith.truncf %143 : vector<32x32xf32> to vector<32x32xbf16>
    %cst_117 = arith.constant dense<0.000000e+00> : vector<64x32xf32>
    %145 = tpu.matmul %0, %144, %cst_117 {dimension_numbers = #tpu.dot_dimension_numbers<[1], [0], [0], [1], [0, 0, 1, 1], [], []>} : vector<64x32xbf16>, vector<32x32xbf16>, vector<64x32xf32> -> vector<64x32xf32>
    %146 = vector.broadcast %130 : vector<1x32xf32> to vector<64x32xf32>
    %147 = arith.addf %145, %146 : vector<64x32xf32>
    %cst_118 = arith.constant 0.000000e+00 : f32
    %148 = vector.broadcast %cst_118 : f32 to vector<64x32xf32>
    %149 = arith.maximumf %147, %148 : vector<64x32xf32>
    %cst_119 = arith.constant dense<0.000000e+00> : vector<64x32xf32>
    %150 = tpu.matmul %149, %124, %cst_119 {dimension_numbers = #tpu.dot_dimension_numbers<[1], [0], [0], [1], [0, 0, 1, 1], [], []>} : vector<64x32xf32>, vector<32x32xf32>, vector<64x32xf32> -> vector<64x32xf32>
    %151 = vector.broadcast %132 : vector<1x32xf32> to vector<64x32xf32>
    %152 = arith.addf %150, %151 : vector<64x32xf32>
    %cst_120 = arith.constant 0.000000e+00 : f32
    %153 = vector.broadcast %cst_120 : f32 to vector<64x32xf32>
    %154 = arith.maximumf %152, %153 : vector<64x32xf32>
    %cst_121 = arith.constant dense<0xFF800000> : vector<32xf32>
    %155 = vector.multi_reduction <maximumf>, %154, %cst_121 [0] : vector<64x32xf32> to vector<32xf32>
    %156 = vector.shape_cast %155 : vector<32xf32> to vector<1x32xf32>
    %c0_122 = arith.constant 0 : index
    %c0_123 = arith.constant 0 : index
    %157 = vector.load %arg5[%c0_122, %c0_123] : memref<32x8xf32, #tpu.memory_space<vmem>>, vector<32x8xf32>
    %cst_124 = arith.constant dense<0.000000e+00> : vector<1x8xf32>
    %158 = tpu.matmul %156, %157, %cst_124 {dimension_numbers = #tpu.dot_dimension_numbers<[1], [0], [0], [1], [0, 0, 1, 1], [], []>} : vector<1x32xf32>, vector<32x8xf32>, vector<1x8xf32> -> vector<1x8xf32>
    %c0_125 = arith.constant 0 : index
    %c0_126 = arith.constant 0 : index
    %159 = vector.load %arg6[%c0_125, %c0_126] : memref<1x8xf32, #tpu.memory_space<vmem>>, vector<1x8xf32>
    %160 = arith.addf %158, %159 : vector<1x8xf32>
    %161 = arith.negf %160 : vector<1x8xf32>
    %162 = math.exp %161 : vector<1x8xf32>
    %cst_127 = arith.constant 1.000000e+00 : f32
    %163 = vector.broadcast %cst_127 : f32 to vector<1x8xf32>
    %164 = arith.addf %163, %162 : vector<1x8xf32>
    %165 = arith.divf %163, %164 : vector<1x8xf32>
    %c0_128 = arith.constant 0 : index
    %c0_129 = arith.constant 0 : index
    %166 = vector.load %arg7[%c0_128, %c0_129] : memref<1x8xf32, #tpu.memory_space<vmem>>, vector<1x8xf32>
    tpu.vector_store %arg7[%c0_128, %c0_129], %165 {strides = array<i32>} : memref<1x8xf32, #tpu.memory_space<vmem>>, vector<1x8xf32>,
    return
  }
}

</mosaic_0001>

<llo_original>
// kernel: tpu_custom_call.1
$region0: #{tpu_custom_call.1}
  #allocation0 [shape = 'u32[]', space=smem, size = 0x4, offset = 0x4, fixed_abs, tag = 'smem constant byte address 0x4 - core index']
  #allocation1 [shape = 'u32[144,128]{1,0:T(1,128)}', space=vmem, size = 0x12000, scoped, tag = 'internal scratch']
  %s0 = inlined_call_operand.vmem [shape: f32[64,32], index: 0, kind: input, shape index: {}]
  %s1 = inlined_call_operand.vmem [shape: bf16[64,32], index: 1, kind: input, shape index: {}]
  %s2 = inlined_call_operand.vmem [shape: bf16[32,64], index: 2, kind: input, shape index: {}]
  %s3 = inlined_call_operand.hbm [shape: f32[16,32,32], index: 3, kind: input, shape index: {}]
  %s4 = inlined_call_operand.vmem [shape: f32[16,1,32], index: 4, kind: input, shape index: {}]
  %s5 = inlined_call_operand.vmem [shape: f32[32,8], index: 5, kind: input, shape index: {}]
  %s6 = inlined_call_operand.vmem [shape: f32[1,8], index: 6, kind: input, shape index: {}]
  %s7 = inlined_call_operand.hbm [shape: f32[1,8], index: 7, kind: output, shape index: {}]
  %s8 = sld [smem:[#allocation0]]
  $region42: #{tpu_custom_call.1} parent=0
    _
  %s10 = ssub.s32 1, %s8
  %s11 = scalar_select 0, %s10, %s8
  $region1: #{tpu_custom_call.1} parent=0
    #allocation2 [shape = 'u8[262144]{0}', space=vmem, size = 0x40000, scoped, tag = 'input window, operand 3, single buffered']
    #allocation3 [shape = 's32[1]{0}', space=sflag, size = 0x4, scoped, tag = 'scoped memory for tpu_custom_call.1']
    #allocation4 [shape = 's32[1]{0}', space=sflag, size = 0x4, scoped, tag = 'scoped memory for tpu_custom_call.1']
    #allocation5 [shape = 'u8[512]{0}', space=vmem, size = 0x400, scoped, tag = 'output window, operand 0, single buffered']
    %12 = vsyncpa [#allocation3], 0
    %13 = vsyncpa [#allocation4], 0
    // Predicated region
    $region2: #{tpu_custom_call.1} parent=1 // pred_check
      _
    $region3: #{tpu_custom_call.1} parent=1 // pred_check_branch
      %15 = sbr.rel (0) target = $region5
    $region4: #{tpu_custom_call.1} parent=1 // pred_region
      _
    $region5: #{tpu_custom_call.1} parent=1 // pred_fallthru
      _
    // Predicated region
    $region6: #{tpu_custom_call.1} parent=1 // pred_check
      _
    $region7: #{tpu_custom_call.1} parent=1 // pred_check_branch
      %17 = sbr.rel (0) target = $region9
    $region8: #{tpu_custom_call.1} parent=1 // pred_region
      _
    $region9: #{tpu_custom_call.1} parent=1 // pred_fallthru
      _
    // Predicated region
    $region10: #{tpu_custom_call.1} parent=1 // pred_check
      _
    $region11: #{tpu_custom_call.1} parent=1 // pred_check_branch
      %19 = sbr.rel (0) target = $region13
    $region12: #{tpu_custom_call.1} parent=1 // pred_region
      _
    $region13: #{tpu_custom_call.1} parent=1 // pred_fallthru
      _
    // Predicated region
    $region14: #{tpu_custom_call.1} parent=1 // pred_check
      _
    $region15: #{tpu_custom_call.1} parent=1 // pred_check_branch
      %21 = sbr.rel (0) target = $region17
    $region16: #{tpu_custom_call.1} parent=1 // pred_region
      %s23 = ssub.s32 8192, 8192
      %24 = vsyncadd [#allocation3], %s23
      %s25 = sshll.u32 [#allocation2], 4
      %s26 = int_to_ptr.vmem [resolvable:$true] %s25
      %31 = dma.hbm_to_vmem [thread:$0]  %s3, 8192, %s26, [#allocation3], 128, 128, 8
    $region17: #{tpu_custom_call.1} parent=1 // pred_fallthru
      _
    // Predicated region
    $region18: #{tpu_custom_call.1} parent=1 // pred_check
      _
    $region19: #{tpu_custom_call.1} parent=1 // pred_check_branch
      %33 = sbr.rel (0) target = $region21
    $region20: #{tpu_custom_call.1} parent=1 // pred_region
      _
    $region21: #{tpu_custom_call.1} parent=1 // pred_fallthru
      _
    // Predicated region
    $region22: #{tpu_custom_call.1} parent=1 // pred_check
      _
    $region23: #{tpu_custom_call.1} parent=1 // pred_check_branch
      %35 = sbr.rel (0) target = $region25
    $region24: #{tpu_custom_call.1} parent=1 // pred_region
      _
    $region25: #{tpu_custom_call.1} parent=1 // pred_fallthru
      _
    // Predicated region
    $region26: #{tpu_custom_call.1} parent=1 // pred_check
      _
    $region27: #{tpu_custom_call.1} parent=1 // pred_check_branch
      %37 = sbr.rel (0) target = $region29
    $region28: #{tpu_custom_call.1} parent=1 // pred_region
      _
    $region29: #{tpu_custom_call.1} parent=1 // pred_fallthru
      _
    // Predicated region
    $region30: #{tpu_custom_call.1} parent=1 // pred_check
      _
    $region31: #{tpu_custom_call.1} parent=1 // pred_check_branch
      %39 = sbr.rel (0) target = $region33
    $region32: #{tpu_custom_call.1} parent=1 // pred_region
      %40 = dma.done [#allocation3], 8192
    $region33: #{tpu_custom_call.1} parent=1 // pred_fallthru
      _
    %v42 = vld [vmem:[%s1] sm:$0xf]
    %v43 = vld [vmem:[%s1 + $0x4] sm:$0xf]
    %v44 = vld [vmem:[%s1 + $0x8] sm:$0xf]
    %v45 = vld [vmem:[%s1 + $0xc] sm:$0xf]
    %v46 = vld [vmem:[%s1 + $0x10] sm:$0xf]
    %v47 = vld [vmem:[%s1 + $0x14] sm:$0xf]
    %v48 = vld [vmem:[%s1 + $0x18] sm:$0xf]
    %v49 = vld [vmem:[%s1 + $0x1c] sm:$0xf]
    %v50 = vld [vmem:[%s2] sm:$0xf]
    %v51 = vld [vmem:[%s2 + $0x4] sm:$0xf]
    %v52 = vld [vmem:[%s2 + $0x8] sm:$0xf]
    %v53 = vld [vmem:[%s2 + $0xc] sm:$0xf]
    %v54 = vld [vmem:[%s0] sm:$0xff]
    %v55 = vld [vmem:[%s0 + $0x8] sm:$0xff]
    %v56 = vld [vmem:[%s0 + $0x10] sm:$0xff]
    %v57 = vld [vmem:[%s0 + $0x18] sm:$0xff]
    %v58 = vld [vmem:[%s0 + $0x20] sm:$0xff]
    %v59 = vld [vmem:[%s0 + $0x28] sm:$0xff]
    %v60 = vld [vmem:[%s0 + $0x30] sm:$0xff]
    %v61 = vld [vmem:[%s0 + $0x38] sm:$0xff]
    %v62 = vld [vmem:[#allocation2] sm:$0xff]
    %v63 = vld [vmem:[#allocation2 + $0x8] sm:$0xff]
    %v64 = vld [vmem:[#allocation2 + $0x10] sm:$0xff]
    %v65 = vld [vmem:[#allocation2 + $0x18] sm:$0xff]
    %s66 = scalar_lea.vmem [#allocation2], 32
    %v67 = vld [vmem:[%s66] sm:$0xff]
    %v68 = vld [vmem:[%s66 + $0x8] sm:$0xff]
    %v69 = vld [vmem:[%s66 + $0x10] sm:$0xff]
    %v70 = vld [vmem:[%s66 + $0x18] sm:$0xff]
    %s71 = scalar_lea.vmem [#allocation2], 64
    %v72 = vld [vmem:[%s71] sm:$0xff]
    %v73 = vld [vmem:[%s71 + $0x8] sm:$0xff]
    %v74 = vld [vmem:[%s71 + $0x10] sm:$0xff]
    %v75 = vld [vmem:[%s71 + $0x18] sm:$0xff]
    %s76 = scalar_lea.vmem [#allocation2], 96
    %v77 = vld [vmem:[%s76] sm:$0xff]
    %v78 = vld [vmem:[%s76 + $0x8] sm:$0xff]
    %v79 = vld [vmem:[%s76 + $0x10] sm:$0xff]
    %v80 = vld [vmem:[%s76 + $0x18] sm:$0xff]
    %v81 = vld [vmem:[%s4] sm:$0x1]
    %s82 = scalar_lea.vmem %s4, 1
    %v83 = vld [vmem:[%s82] sm:$0x1]
    %s84 = scalar_lea.vmem %s4, 2
    %v85 = vld [vmem:[%s84] sm:$0x1]
    %s86 = scalar_lea.vmem %s4, 3
    %v87 = vld [vmem:[%s86] sm:$0x1]
    %v89 = vlaneseq
    %v90 = vshrl.u32 %v89, 7
    %v91 = vsub.s32 0, %v90
    %v92 = vrot.slane %v81, %v91
    %vm94 = vcmask 261120
    %v96 = vsel %vm94, %v54, 0
    %v99 = vsel %vm94, %v55, 0
    %v102 = vsel %vm94, %v56, 0
    %v105 = vsel %vm94, %v57, 0
    %v108 = vsel %vm94, %v58, 0
    %v111 = vsel %vm94, %v59, 0
    %v114 = vsel %vm94, %v60, 0
    %v117 = vsel %vm94, %v61, 0
    %119 = vmatprep.subr.mxu0 0.0
    %120 = vmatpush1.msra.mxu0 0.0
    %121 = vmatprep.subr.mxu0 0.0
    %122 = vmatpush1.msra.mxu0 0.0
    %123 = vmatprep.subr.mxu0 0.0
    %124 = vmatpush1.msra.mxu0 0.0
    %125 = vmatprep.subr.mxu0 0.0
    %126 = vmatpush1.msra.mxu0 0.0
    %127 = vmatprep.subr.mxu0 0.0
    %128 = vmatpush1.msra.mxu0 0.0
    %129 = vmatprep.subr.mxu0 0.0
    %130 = vmatpush1.msra.mxu0 0.0
    %131 = vmatprep.subr.mxu0 0.0
    %132 = vmatpush1.msra.mxu0 0.0
    %133 = vmatprep.subr.mxu0 0.0
    %134 = vmatpush1.msra.mxu0 0.0
    %135 = vmatprep.subr.mxu0 0.0
    %136 = vmatpush1.msra.mxu0 0.0
    %137 = vmatprep.subr.mxu0 0.0
    %138 = vmatpush1.msra.mxu0 0.0
    %139 = vmatprep.subr.mxu0 0.0
    %140 = vmatpush1.msra.mxu0 0.0
    %141 = vmatprep.subr.mxu0 0.0
    %142 = vmatpush1.msra.mxu0 0.0
    %143 = vmatprep.subr.mxu0 0.0
    %144 = vmatpush1.msra.mxu0 %v65
    %145 = vmatprep.subr.mxu0 0.0
    %146 = vmatpush1.msra.mxu0 %v64
    %147 = vmatprep.subr.mxu0 0.0
    %148 = vmatpush1.msra.mxu0 %v63
    %149 = vmatprep.subr.mxu0 0.0
    %150 = vmatpush1.msra.mxu0 %v62
    %151 = vmatprep.subr.mxu0 0.0
    %152 = vmatpush2.msra.mxu0 0.0
    %153 = vmatprep.subr.mxu0 0.0
    %154 = vmatpush2.msra.mxu0 0.0
    %155 = vmatprep.subr.mxu0 0.0
    %156 = vmatpush2.msra.mxu0 0.0
    %157 = vmatprep.subr.mxu0 0.0
    %158 = vmatpush2.msra.mxu0 0.0
    %159 = vmatprep.subr.mxu0 0.0
    %160 = vmatpush2.msra.mxu0 0.0
    %161 = vmatprep.subr.mxu0 0.0
    %162 = vmatpush2.msra.mxu0 0.0
    %163 = vmatprep.subr.mxu0 0.0
    %164 = vmatpush2.msra.mxu0 0.0
    %165 = vmatprep.subr.mxu0 0.0
    %166 = vmatpush2.msra.mxu0 0.0
    %167 = vmatprep.subr.mxu0 0.0
    %168 = vmatpush2.msra.mxu0 0.0
    %169 = vmatprep.subr.mxu0 0.0
    %170 = vmatpush2.msra.mxu0 0.0
    %171 = vmatprep.subr.mxu0 0.0
    %172 = vmatpush2.msra.mxu0 0.0
    %173 = vmatprep.subr.mxu0 0.0
    %174 = vmatpush2.msra.mxu0 0.0
    %175 = vmatprep.subr.mxu0 0.0
    %176 = vmatpush2.msra.mxu0 0.0
    %177 = vmatprep.subr.mxu0 0.0
    %178 = vmatpush2.msra.mxu0 0.0
    %179 = vmatprep.subr.mxu0 0.0
    %180 = vmatpush2.msra.mxu0 0.0
    %181 = vmatprep.subr.mxu0 0.0
    %182 = vmatpush2.msra.mxu0 0.0
    %183 = vmatprep.mubr.f32.mxu0 0.0
    %184 = vmatmul.mubr.f32.gmra.mxu0 %v96
    %v185 = vpop.f32.mrf.mxu0
    %v186 = vadd.f32 %v92, %v185
    %v187 = vpop.f32.mrf.mxu0
    %188 = vmatprep.mubr.f32.mxu0 0.0
    %189 = vmatmul.mubr.f32.gmra.mxu0 %v99
    %v190 = vpop.f32.mrf.mxu0
    %v191 = vadd.f32 %v92, %v190
    %v192 = vpop.f32.mrf.mxu0
    %193 = vmatprep.mubr.f32.mxu0 0.0
    %194 = vmatmul.mubr.f32.gmra.mxu0 %v102
    %v195 = vpop.f32.mrf.mxu0
    %v196 = vadd.f32 %v92, %v195
    %v197 = vpop.f32.mrf.mxu0
    %198 = vmatprep.mubr.f32.mxu0 0.0
    %199 = vmatmul.mubr.f32.gmra.mxu0 %v105
    %v200 = vpop.f32.mrf.mxu0
    %v201 = vadd.f32 %v92, %v200
    %v202 = vpop.f32.mrf.mxu0
    %203 = vmatprep.mubr.f32.mxu0 0.0
    %204 = vmatmul.mubr.f32.gmra.mxu0 %v108
    %v205 = vpop.f32.mrf.mxu0
    %v206 = vadd.f32 %v92, %v205
    %v207 = vpop.f32.mrf.mxu0
    %208 = vmatprep.mubr.f32.mxu0 0.0
    %209 = vmatmul.mubr.f32.gmra.mxu0 %v111
    %v210 = vpop.f32.mrf.mxu0
    %v211 = vadd.f32 %v92, %v210
    %v212 = vpop.f32.mrf.mxu0
    %213 = vmatprep.mubr.f32.mxu0 0.0
    %214 = vmatmul.mubr.f32.gmra.mxu0 %v114
    %v215 = vpop.f32.mrf.mxu0
    %v216 = vadd.f32 %v92, %v215
    %v217 = vpop.f32.mrf.mxu0
    %218 = vmatprep.mubr.f32.mxu0 0.0
    %219 = vmatmul.mubr.f32.gmra.mxu0 %v117
    %v220 = vpop.f32.mrf.mxu0
    %v221 = vadd.f32 %v92, %v220
    %v222 = vpop.f32.mrf.mxu0
    %223 = vdwg.mxu0
    %v224 = vmax.f32 %v186, 0.0
    %v225 = vmax.f32 %v191, 0.0
    %v226 = vmax.f32 %v196, 0.0
    %v227 = vmax.f32 %v201, 0.0
    %v228 = vmax.f32 %v206, 0.0
    %v229 = vmax.f32 %v211, 0.0
    %v230 = vmax.f32 %v216, 0.0
    %v231 = vmax.f32 %v221, 0.0
    %v233 = vlaneseq
    %v234 = vshrl.u32 %v233, 7
    %v235 = vsub.s32 0, %v234
    %v236 = vrot.slane %v83, %v235
    %v239 = vsel %vm94, %v224, 0
    %v242 = vsel %vm94, %v225, 0
    %v245 = vsel %vm94, %v226, 0
    %v248 = vsel %vm94, %v227, 0
    %v251 = vsel %vm94, %v228, 0
    %v254 = vsel %vm94, %v229, 0
    %v257 = vsel %vm94, %v230, 0
    %v260 = vsel %vm94, %v231, 0
    %262 = vmatprep.subr.mxu0 0.0
    %263 = vmatpush1.msra.mxu0 0.0
    %264 = vmatprep.subr.mxu0 0.0
    %265 = vmatpush1.msra.mxu0 0.0
    %266 = vmatprep.subr.mxu0 0.0
    %267 = vmatpush1.msra.mxu0 0.0
    %268 = vmatprep.subr.mxu0 0.0
    %269 = vmatpush1.msra.mxu0 0.0
    %270 = vmatprep.subr.mxu0 0.0
    %271 = vmatpush1.msra.mxu0 0.0
    %272 = vmatprep.subr.mxu0 0.0
    %273 = vmatpush1.msra.mxu0 0.0
    %274 = vmatprep.subr.mxu0 0.0
    %275 = vmatpush1.msra.mxu0 0.0
    %276 = vmatprep.subr.mxu0 0.0
    %277 = vmatpush1.msra.mxu0 0.0
    %278 = vmatprep.subr.mxu0 0.0
    %279 = vmatpush1.msra.mxu0 0.0
    %280 = vmatprep.subr.mxu0 0.0
    %281 = vmatpush1.msra.mxu0 0.0
    %282 = vmatprep.subr.mxu0 0.0
    %283 = vmatpush1.msra.mxu0 0.0
    %284 = vmatprep.subr.mxu0 0.0
    %285 = vmatpush1.msra.mxu0 0.0
    %286 = vmatprep.subr.mxu0 0.0
    %287 = vmatpush1.msra.mxu0 %v70
    %288 = vmatprep.subr.mxu0 0.0
    %289 = vmatpush1.msra.mxu0 %v69
    %290 = vmatprep.subr.mxu0 0.0
    %291 = vmatpush1.msra.mxu0 %v68
    %292 = vmatprep.subr.mxu0 0.0
    %293 = vmatpush1.msra.mxu0 %v67
    %294 = vmatprep.subr.mxu0 0.0
    %295 = vmatpush2.msra.mxu0 0.0
    %296 = vmatprep.subr.mxu0 0.0
    %297 = vmatpush2.msra.mxu0 0.0
    %298 = vmatprep.subr.mxu0 0.0
    %299 = vmatpush2.msra.mxu0 0.0
    %300 = vmatprep.subr.mxu0 0.0
    %301 = vmatpush2.msra.mxu0 0.0
    %302 = vmatprep.subr.mxu0 0.0
    %303 = vmatpush2.msra.mxu0 0.0
    %304 = vmatprep.subr.mxu0 0.0
    %305 = vmatpush2.msra.mxu0 0.0
    %306 = vmatprep.subr.mxu0 0.0
    %307 = vmatpush2.msra.mxu0 0.0
    %308 = vmatprep.subr.mxu0 0.0
    %309 = vmatpush2.msra.mxu0 0.0
    %310 = vmatprep.subr.mxu0 0.0
    %311 = vmatpush2.msra.mxu0 0.0
    %312 = vmatprep.subr.mxu0 0.0
    %313 = vmatpush2.msra.mxu0 0.0
    %314 = vmatprep.subr.mxu0 0.0
    %315 = vmatpush2.msra.mxu0 0.0
    %316 = vmatprep.subr.mxu0 0.0
    %317 = vmatpush2.msra.mxu0 0.0
    %318 = vmatprep.subr.mxu0 0.0
    %319 = vmatpush2.msra.mxu0 0.0
    %320 = vmatprep.subr.mxu0 0.0
    %321 = vmatpush2.msra.mxu0 0.0
    %322 = vmatprep.subr.mxu0 0.0
    %323 = vmatpush2.msra.mxu0 0.0
    %324 = vmatprep.subr.mxu0 0.0
    %325 = vmatpush2.msra.mxu0 0.0
    %326 = vmatprep.mubr.f32.mxu0 0.0
    %327 = vmatmul.mubr.f32.gmra.mxu0 %v239
    %v328 = vpop.f32.mrf.mxu0
    %v329 = vadd.f32 %v236, %v328
    %v330 = vpop.f32.mrf.mxu0
    %331 = vmatprep.mubr.f32.mxu0 0.0
    %332 = vmatmul.mubr.f32.gmra.mxu0 %v242
    %v333 = vpop.f32.mrf.mxu0
    %v334 = vadd.f32 %v236, %v333
    %v335 = vpop.f32.mrf.mxu0
    %336 = vmatprep.mubr.f32.mxu0 0.0
    %337 = vmatmul.mubr.f32.gmra.mxu0 %v245
    %v338 = vpop.f32.mrf.mxu0
    %v339 = vadd.f32 %v236, %v338
    %v340 = vpop.f32.mrf.mxu0
    %341 = vmatprep.mubr.f32.mxu0 0.0
    %342 = vmatmul.mubr.f32.gmra.mxu0 %v248
    %v343 = vpop.f32.mrf.mxu0
    %v344 = vadd.f32 %v236, %v343
    %v345 = vpop.f32.mrf.mxu0
    %346 = vmatprep.mubr.f32.mxu0 0.0
    %347 = vmatmul.mubr.f32.gmra.mxu0 %v251
    %v348 = vpop.f32.mrf.mxu0
    %v349 = vadd.f32 %v236, %v348
    %v350 = vpop.f32.mrf.mxu0
    %351 = vmatprep.mubr.f32.mxu0 0.0
    %352 = vmatmul.mubr.f32.gmra.mxu0 %v254
    %v353 = vpop.f32.mrf.mxu0
    %v354 = vadd.f32 %v236, %v353
    %v355 = vpop.f32.mrf.mxu0
    %356 = vmatprep.mubr.f32.mxu0 0.0
    %357 = vmatmul.mubr.f32.gmra.mxu0 %v257
    %v358 = vpop.f32.mrf.mxu0
    %v359 = vadd.f32 %v236, %v358
    %v360 = vpop.f32.mrf.mxu0
    %361 = vmatprep.mubr.f32.mxu0 0.0
    %362 = vmatmul.mubr.f32.gmra.mxu0 %v260
    %v363 = vpop.f32.mrf.mxu0
    %v364 = vadd.f32 %v236, %v363
    %v365 = vpop.f32.mrf.mxu0
    %366 = vdwg.mxu0
    %v367 = vmax.f32 %v329, 0.0
    %v368 = vmax.f32 %v334, 0.0
    %v369 = vmax.f32 %v339, 0.0
    %v370 = vmax.f32 %v344, 0.0
    %v371 = vmax.f32 %v349, 0.0
    %v372 = vmax.f32 %v354, 0.0
    %v373 = vmax.f32 %v359, 0.0
    %v374 = vmax.f32 %v364, 0.0
    %v375 = vpack.c.bf16 %v368, %v367
    %v376 = vpack.c.bf16 %v370, %v369
    %v377 = vpack.c.bf16 %v372, %v371
    %v378 = vpack.c.bf16 %v374, %v373
    %v383 = vunpack.c.l.b16 %v50
    %v384 = vunpack.c.l.b16 %v51
    %v385 = vunpack.c.l.b16 %v52
    %v386 = vunpack.c.l.b16 %v53
    %v387 = vpack.c.b16 %v384, %v383
    %v388 = vpack.c.b16 %v386, %v385
    %vm389 = vcmask 523264
    %v391 = vsel %vm389, %v387, 0
    %v394 = vsel %vm389, %v388, 0
    %396 = vmatprep.subr.bf16.mxu0 0
    %397 = vmatpush1.bf16.msra.mxu0 0
    %398 = vmatprep.subr.bf16.mxu0 0
    %399 = vmatpush1.bf16.msra.mxu0 0
    %400 = vmatprep.subr.bf16.mxu0 0
    %401 = vmatpush1.bf16.msra.mxu0 0
    %402 = vmatprep.subr.bf16.mxu0 0
    %403 = vmatpush1.bf16.msra.mxu0 0
    %404 = vmatprep.subr.bf16.mxu0 0
    %405 = vmatpush1.bf16.msra.mxu0 %v378
    %406 = vmatprep.subr.bf16.mxu0 0
    %407 = vmatpush1.bf16.msra.mxu0 %v377
    %408 = vmatprep.subr.bf16.mxu0 0
    %409 = vmatpush1.bf16.msra.mxu0 %v376
    %410 = vmatprep.subr.bf16.mxu0 0
    %411 = vmatpush1.bf16.msra.mxu0 %v375
    %412 = vmatprep.subr.bf16.mxu0 0
    %413 = vmatpush2.bf16.msra.mxu0 0
    %414 = vmatprep.subr.bf16.mxu0 0
    %415 = vmatpush2.bf16.msra.mxu0 0
    %416 = vmatprep.subr.bf16.mxu0 0
    %417 = vmatpush2.bf16.msra.mxu0 0
    %418 = vmatprep.subr.bf16.mxu0 0
    %419 = vmatpush2.bf16.msra.mxu0 0
    %420 = vmatprep.subr.bf16.mxu0 0
    %421 = vmatpush2.bf16.msra.mxu0 0
    %422 = vmatprep.subr.bf16.mxu0 0
    %423 = vmatpush2.bf16.msra.mxu0 0
    %424 = vmatprep.subr.bf16.mxu0 0
    %425 = vmatpush2.bf16.msra.mxu0 0
    %426 = vmatprep.subr.bf16.mxu0 0
    %427 = vmatpush2.bf16.msra.mxu0 0
    %428 = vmatprep.mubr.bf16.mxu0 0
    %429 = vmatmul.mubr.bf16.gmra.mxu0 %v391
    %v430 = vpop.f32.mrf.mxu0
    %v431 = vadd.f32 0.0, %v430
    %v432 = vpop.f32.mrf.mxu0
    %v433 = vpop.f32.mrf.mxu0
    %v434 = vadd.f32 0.0, %v433
    %v435 = vpop.f32.mrf.mxu0
    %436 = vmatprep.mubr.bf16.mxu0 0
    %437 = vmatmul.mubr.bf16.gmra.mxu0 %v394
    %v438 = vpop.f32.mrf.mxu0
    %v439 = vadd.f32 0.0, %v438
    %v440 = vpop.f32.mrf.mxu0
    %v441 = vpop.f32.mrf.mxu0
    %v442 = vadd.f32 0.0, %v441
    %v443 = vpop.f32.mrf.mxu0
    %444 = vdwg.mxu0
    %v446 = vlaneseq
    %v447 = vshrl.u32 %v446, 7
    %v448 = vsub.s32 0, %v447
    %v449 = vrot.slane %v85, %v448
    %v452 = vsel %vm94, %v431, 0
    %v455 = vsel %vm94, %v434, 0
    %v458 = vsel %vm94, %v439, 0
    %v461 = vsel %vm94, %v442, 0
    %463 = vmatprep.subr.mxu0 0.0
    %464 = vmatpush1.msra.mxu0 0.0
    %465 = vmatprep.subr.mxu0 0.0
    %466 = vmatpush1.msra.mxu0 0.0
    %467 = vmatprep.subr.mxu0 0.0
    %468 = vmatpush1.msra.mxu0 0.0
    %469 = vmatprep.subr.mxu0 0.0
    %470 = vmatpush1.msra.mxu0 0.0
    %471 = vmatprep.subr.mxu0 0.0
    %472 = vmatpush1.msra.mxu0 0.0
    %473 = vmatprep.subr.mxu0 0.0
    %474 = vmatpush1.msra.mxu0 0.0
    %475 = vmatprep.subr.mxu0 0.0
    %476 = vmatpush1.msra.mxu0 0.0
    %477 = vmatprep.subr.mxu0 0.0
    %478 = vmatpush1.msra.mxu0 0.0
    %479 = vmatprep.subr.mxu0 0.0
    %480 = vmatpush1.msra.mxu0 0.0
    %481 = vmatprep.subr.mxu0 0.0
    %482 = vmatpush1.msra.mxu0 0.0
    %483 = vmatprep.subr.mxu0 0.0
    %484 = vmatpush1.msra.mxu0 0.0
    %485 = vmatprep.subr.mxu0 0.0
    %486 = vmatpush1.msra.mxu0 0.0
    %487 = vmatprep.subr.mxu0 0.0
    %488 = vmatpush1.msra.mxu0 %v75
    %489 = vmatprep.subr.mxu0 0.0
    %490 = vmatpush1.msra.mxu0 %v74
    %491 = vmatprep.subr.mxu0 0.0
    %492 = vmatpush1.msra.mxu0 %v73
    %493 = vmatprep.subr.mxu0 0.0
    %494 = vmatpush1.msra.mxu0 %v72
    %495 = vmatprep.subr.mxu0 0.0
    %496 = vmatpush2.msra.mxu0 0.0
    %497 = vmatprep.subr.mxu0 0.0
    %498 = vmatpush2.msra.mxu0 0.0
    %499 = vmatprep.subr.mxu0 0.0
    %500 = vmatpush2.msra.mxu0 0.0
    %501 = vmatprep.subr.mxu0 0.0
    %502 = vmatpush2.msra.mxu0 0.0
    %503 = vmatprep.subr.mxu0 0.0
    %504 = vmatpush2.msra.mxu0 0.0
    %505 = vmatprep.subr.mxu0 0.0
    %506 = vmatpush2.msra.mxu0 0.0
    %507 = vmatprep.subr.mxu0 0.0
    %508 = vmatpush2.msra.mxu0 0.0
    %509 = vmatprep.subr.mxu0 0.0
    %510 = vmatpush2.msra.mxu0 0.0
    %511 = vmatprep.subr.mxu0 0.0
    %512 = vmatpush2.msra.mxu0 0.0
    %513 = vmatprep.subr.mxu0 0.0
    %514 = vmatpush2.msra.mxu0 0.0
    %515 = vmatprep.subr.mxu0 0.0
    %516 = vmatpush2.msra.mxu0 0.0
    %517 = vmatprep.subr.mxu0 0.0
    %518 = vmatpush2.msra.mxu0 0.0
    %519 = vmatprep.subr.mxu0 0.0
    %520 = vmatpush2.msra.mxu0 0.0
    %521 = vmatprep.subr.mxu0 0.0
    %522 = vmatpush2.msra.mxu0 0.0
    %523 = vmatprep.subr.mxu0 0.0
    %524 = vmatpush2.msra.mxu0 0.0
    %525 = vmatprep.subr.mxu0 0.0
    %526 = vmatpush2.msra.mxu0 0.0
    %527 = vmatprep.mubr.f32.mxu0 0.0
    %528 = vmatmul.mubr.f32.gmra.mxu0 %v452
    %v529 = vpop.f32.mrf.mxu0
    %v530 = vadd.f32 %v449, %v529
    %v531 = vpop.f32.mrf.mxu0
    %532 = vmatprep.mubr.f32.mxu0 0.0
    %533 = vmatmul.mubr.f32.gmra.mxu0 %v455
    %v534 = vpop.f32.mrf.mxu0
    %v535 = vadd.f32 %v449, %v534
    %v536 = vpop.f32.mrf.mxu0
    %537 = vmatprep.mubr.f32.mxu0 0.0
    %538 = vmatmul.mubr.f32.gmra.mxu0 %v458
    %v539 = vpop.f32.mrf.mxu0
    %v540 = vadd.f32 %v449, %v539
    %v541 = vpop.f32.mrf.mxu0
    %542 = vmatprep.mubr.f32.mxu0 0.0
    %543 = vmatmul.mubr.f32.gmra.mxu0 %v461
    %v544 = vpop.f32.mrf.mxu0
    %v545 = vadd.f32 %v449, %v544
    %v546 = vpop.f32.mrf.mxu0
    %547 = vdwg.mxu0
    %v548 = vmax.f32 %v530, 0.0
    %v549 = vmax.f32 %v535, 0.0
    %v550 = vmax.f32 %v540, 0.0
    %v551 = vmax.f32 %v545, 0.0
    %v553 = vlaneseq
    %v554 = vshrl.u32 %v553, 7
    %v555 = vsub.s32 0, %v554
    %v556 = vrot.slane %v87, %v555
    %v559 = vsel %vm94, %v548, 0
    %v562 = vsel %vm94, %v549, 0
    %v565 = vsel %vm94, %v550, 0
    %v568 = vsel %vm94, %v551, 0
    %570 = vmatprep.subr.mxu0 0.0
    %571 = vmatpush1.msra.mxu0 0.0
    %572 = vmatprep.subr.mxu0 0.0
    %573 = vmatpush1.msra.mxu0 0.0
    %574 = vmatprep.subr.mxu0 0.0
    %575 = vmatpush1.msra.mxu0 0.0
    %576 = vmatprep.subr.mxu0 0.0
    %577 = vmatpush1.msra.mxu0 0.0
    %578 = vmatprep.subr.mxu0 0.0
    %579 = vmatpush1.msra.mxu0 0.0
    %580 = vmatprep.subr.mxu0 0.0
    %581 = vmatpush1.msra.mxu0 0.0
    %582 = vmatprep.subr.mxu0 0.0
    %583 = vmatpush1.msra.mxu0 0.0
    %584 = vmatprep.subr.mxu0 0.0
    %585 = vmatpush1.msra.mxu0 0.0
    %586 = vmatprep.subr.mxu0 0.0
    %587 = vmatpush1.msra.mxu0 0.0
    %588 = vmatprep.subr.mxu0 0.0
    %589 = vmatpush1.msra.mxu0 0.0
    %590 = vmatprep.subr.mxu0 0.0
    %591 = vmatpush1.msra.mxu0 0.0
    %592 = vmatprep.subr.mxu0 0.0
    %593 = vmatpush1.msra.mxu0 0.0
    %594 = vmatprep.subr.mxu0 0.0
    %595 = vmatpush1.msra.mxu0 %v80
    %596 = vmatprep.subr.mxu0 0.0
    %597 = vmatpush1.msra.mxu0 %v79
    %598 = vmatprep.subr.mxu0 0.0
    %599 = vmatpush1.msra.mxu0 %v78
    %600 = vmatprep.subr.mxu0 0.0
    %601 = vmatpush1.msra.mxu0 %v77
    %602 = vmatprep.subr.mxu0 0.0
    %603 = vmatpush2.msra.mxu0 0.0
    %604 = vmatprep.subr.mxu0 0.0
    %605 = vmatpush2.msra.mxu0 0.0
    %606 = vmatprep.subr.mxu0 0.0
    %607 = vmatpush2.msra.mxu0 0.0
    %608 = vmatprep.subr.mxu0 0.0
    %609 = vmatpush2.msra.mxu0 0.0
    %610 = vmatprep.subr.mxu0 0.0
    %611 = vmatpush2.msra.mxu0 0.0
    %612 = vmatprep.subr.mxu0 0.0
    %613 = vmatpush2.msra.mxu0 0.0
    %614 = vmatprep.subr.mxu0 0.0
    %615 = vmatpush2.msra.mxu0 0.0
    %616 = vmatprep.subr.mxu0 0.0
    %617 = vmatpush2.msra.mxu0 0.0
    %618 = vmatprep.subr.mxu0 0.0
    %619 = vmatpush2.msra.mxu0 0.0
    %620 = vmatprep.subr.mxu0 0.0
    %621 = vmatpush2.msra.mxu0 0.0
    %622 = vmatprep.subr.mxu0 0.0
    %623 = vmatpush2.msra.mxu0 0.0
    %624 = vmatprep.subr.mxu0 0.0
    %625 = vmatpush2.msra.mxu0 0.0
    %626 = vmatprep.subr.mxu0 0.0
    %627 = vmatpush2.msra.mxu0 0.0
    %628 = vmatprep.subr.mxu0 0.0
    %629 = vmatpush2.msra.mxu0 0.0
    %630 = vmatprep.subr.mxu0 0.0
    %631 = vmatpush2.msra.mxu0 0.0
    %632 = vmatprep.subr.mxu0 0.0
    %633 = vmatpush2.msra.mxu0 0.0
    %634 = vmatprep.mubr.f32.mxu0 0.0
    %635 = vmatmul.mubr.f32.gmra.mxu0 %v559
    %v636 = vpop.f32.mrf.mxu0
    %v637 = vadd.f32 %v556, %v636
    %v638 = vpop.f32.mrf.mxu0
    %639 = vmatprep.mubr.f32.mxu0 0.0
    %640 = vmatmul.mubr.f32.gmra.mxu0 %v562
    %v641 = vpop.f32.mrf.mxu0
    %v642 = vadd.f32 %v556, %v641
    %v643 = vpop.f32.mrf.mxu0
    %644 = vmatprep.mubr.f32.mxu0 0.0
    %645 = vmatmul.mubr.f32.gmra.mxu0 %v565
    %v646 = vpop.f32.mrf.mxu0
    %v647 = vadd.f32 %v556, %v646
    %v648 = vpop.f32.mrf.mxu0
    %649 = vmatprep.mubr.f32.mxu0 0.0
    %650 = vmatmul.mubr.f32.gmra.mxu0 %v568
    %v651 = vpop.f32.mrf.mxu0
    %v652 = vadd.f32 %v556, %v651
    %v653 = vpop.f32.mrf.mxu0
    %654 = vdwg.mxu0
    %v655 = vmax.f32 %v637, 0.0
    %v656 = vmax.f32 %v642, 0.0
    %v657 = vmax.f32 %v647, 0.0
    %v658 = vmax.f32 %v652, 0.0
    %s659 = scalar_lea.vmem [#allocation2], 128
    %v660 = vld [vmem:[%s659] sm:$0xff]
    %v661 = vld [vmem:[%s659 + $0x8] sm:$0xff]
    %v662 = vld [vmem:[%s659 + $0x10] sm:$0xff]
    %v663 = vld [vmem:[%s659 + $0x18] sm:$0xff]
    %s664 = scalar_lea.vmem [#allocation2], 160
    %v665 = vld [vmem:[%s664] sm:$0xff]
    %v666 = vld [vmem:[%s664 + $0x8] sm:$0xff]
    %v667 = vld [vmem:[%s664 + $0x10] sm:$0xff]
    %v668 = vld [vmem:[%s664 + $0x18] sm:$0xff]
    %s669 = scalar_lea.vmem [#allocation2], 192
    %v670 = vld [vmem:[%s669] sm:$0xff]
    %v671 = vld [vmem:[%s669 + $0x8] sm:$0xff]
    %v672 = vld [vmem:[%s669 + $0x10] sm:$0xff]
    %v673 = vld [vmem:[%s669 + $0x18] sm:$0xff]
    %s674 = scalar_lea.vmem [#allocation2], 224
    %v675 = vld [vmem:[%s674] sm:$0xff]
    %v676 = vld [vmem:[%s674 + $0x8] sm:$0xff]
    %v677 = vld [vmem:[%s674 + $0x10] sm:$0xff]
    %v678 = vld [vmem:[%s674 + $0x18] sm:$0xff]
    %s679 = scalar_lea.vmem %s4, 4
    %v680 = vld [vmem:[%s679] sm:$0x1]
    %s681 = scalar_lea.vmem %s4, 5
    %v682 = vld [vmem:[%s681] sm:$0x1]
    %s683 = scalar_lea.vmem %s4, 6
    %v684 = vld [vmem:[%s683] sm:$0x1]
    %s685 = scalar_lea.vmem %s4, 7
    %v686 = vld [vmem:[%s685] sm:$0x1]
    %v688 = vlaneseq
    %v689 = vshrl.u32 %v688, 7
    %v690 = vsub.s32 0, %v689
    %v691 = vrot.slane %v680, %v690
    %v694 = vsel %vm94, %v655, 0
    %v697 = vsel %vm94, %v656, 0
    %v700 = vsel %vm94, %v657, 0
    %v703 = vsel %vm94, %v658, 0
    %705 = vmatprep.subr.mxu0 0.0
    %706 = vmatpush1.msra.mxu0 0.0
    %707 = vmatprep.subr.mxu0 0.0
    %708 = vmatpush1.msra.mxu0 0.0
    %709 = vmatprep.subr.mxu0 0.0
    %710 = vmatpush1.msra.mxu0 0.0
    %711 = vmatprep.subr.mxu0 0.0
    %712 = vmatpush1.msra.mxu0 0.0
    %713 = vmatprep.subr.mxu0 0.0
    %714 = vmatpush1.msra.mxu0 0.0
    %715 = vmatprep.subr.mxu0 0.0
    %716 = vmatpush1.msra.mxu0 0.0
    %717 = vmatprep.subr.mxu0 0.0
    %718 = vmatpush1.msra.mxu0 0.0
    %719 = vmatprep.subr.mxu0 0.0
    %720 = vmatpush1.msra.mxu0 0.0
    %721 = vmatprep.subr.mxu0 0.0
    %722 = vmatpush1.msra.mxu0 0.0
    %723 = vmatprep.subr.mxu0 0.0
    %724 = vmatpush1.msra.mxu0 0.0
    %725 = vmatprep.subr.mxu0 0.0
    %726 = vmatpush1.msra.mxu0 0.0
    %727 = vmatprep.subr.mxu0 0.0
    %728 = vmatpush1.msra.mxu0 0.0
    %729 = vmatprep.subr.mxu0 0.0
    %730 = vmatpush1.msra.mxu0 %v663
    %731 = vmatprep.subr.mxu0 0.0
    %732 = vmatpush1.msra.mxu0 %v662
    %733 = vmatprep.subr.mxu0 0.0
    %734 = vmatpush1.msra.mxu0 %v661
    %735 = vmatprep.subr.mxu0 0.0
    %736 = vmatpush1.msra.mxu0 %v660
    %737 = vmatprep.subr.mxu0 0.0
    %738 = vmatpush2.msra.mxu0 0.0
    %739 = vmatprep.subr.mxu0 0.0
    %740 = vmatpush2.msra.mxu0 0.0
    %741 = vmatprep.subr.mxu0 0.0
    %742 = vmatpush2.msra.mxu0 0.0
    %743 = vmatprep.subr.mxu0 0.0
    %744 = vmatpush2.msra.mxu0 0.0
    %745 = vmatprep.subr.mxu0 0.0
    %746 = vmatpush2.msra.mxu0 0.0
    %747 = vmatprep.subr.mxu0 0.0
    %748 = vmatpush2.msra.mxu0 0.0
    %749 = vmatprep.subr.mxu0 0.0
    %750 = vmatpush2.msra.mxu0 0.0
    %751 = vmatprep.subr.mxu0 0.0
    %752 = vmatpush2.msra.mxu0 0.0
    %753 = vmatprep.subr.mxu0 0.0
    %754 = vmatpush2.msra.mxu0 0.0
    %755 = vmatprep.subr.mxu0 0.0
    %756 = vmatpush2.msra.mxu0 0.0
    %757 = vmatprep.subr.mxu0 0.0
    %758 = vmatpush2.msra.mxu0 0.0
    %759 = vmatprep.subr.mxu0 0.0
    %760 = vmatpush2.msra.mxu0 0.0
    %761 = vmatprep.subr.mxu0 0.0
    %762 = vmatpush2.msra.mxu0 0.0
    %763 = vmatprep.subr.mxu0 0.0
    %764 = vmatpush2.msra.mxu0 0.0
    %765 = vmatprep.subr.mxu0 0.0
    %766 = vmatpush2.msra.mxu0 0.0
    %767 = vmatprep.subr.mxu0 0.0
    %768 = vmatpush2.msra.mxu0 0.0
    %769 = vmatprep.mubr.f32.mxu0 0.0
    %770 = vmatmul.mubr.f32.gmra.mxu0 %v694
    %v771 = vpop.f32.mrf.mxu0
    %v772 = vadd.f32 %v691, %v771
    %v773 = vpop.f32.mrf.mxu0
    %774 = vmatprep.mubr.f32.mxu0 0.0
    %775 = vmatmul.mubr.f32.gmra.mxu0 %v697
    %v776 = vpop.f32.mrf.mxu0
    %v777 = vadd.f32 %v691, %v776
    %v778 = vpop.f32.mrf.mxu0
    %779 = vmatprep.mubr.f32.mxu0 0.0
    %780 = vmatmul.mubr.f32.gmra.mxu0 %v700
    %v781 = vpop.f32.mrf.mxu0
    %v782 = vadd.f32 %v691, %v781
    %v783 = vpop.f32.mrf.mxu0
    %784 = vmatprep.mubr.f32.mxu0 0.0
    %785 = vmatmul.mubr.f32.gmra.mxu0 %v703
    %v786 = vpop.f32.mrf.mxu0
    %v787 = vadd.f32 %v691, %v786
    %v788 = vpop.f32.mrf.mxu0
    %789 = vdwg.mxu0
    %v790 = vmax.f32 %v772, 0.0
    %v791 = vmax.f32 %v777, 0.0
    %v792 = vmax.f32 %v782, 0.0
    %v793 = vmax.f32 %v787, 0.0
    %v795 = vlaneseq
    %v796 = vshrl.u32 %v795, 7
    %v797 = vsub.s32 0, %v796
    %v798 = vrot.slane %v682, %v797
    %v801 = vsel %vm94, %v790, 0
    %v804 = vsel %vm94, %v791, 0
    %v807 = vsel %vm94, %v792, 0
    %v810 = vsel %vm94, %v793, 0
    %812 = vmatprep.subr.mxu0 0.0
    %813 = vmatpush1.msra.mxu0 0.0
    %814 = vmatprep.subr.mxu0 0.0
    %815 = vmatpush1.msra.mxu0 0.0
    %816 = vmatprep.subr.mxu0 0.0
    %817 = vmatpush1.msra.mxu0 0.0
    %818 = vmatprep.subr.mxu0 0.0
    %819 = vmatpush1.msra.mxu0 0.0
    %820 = vmatprep.subr.mxu0 0.0
    %821 = vmatpush1.msra.mxu0 0.0
    %822 = vmatprep.subr.mxu0 0.0
    %823 = vmatpush1.msra.mxu0 0.0
    %824 = vmatprep.subr.mxu0 0.0
    %825 = vmatpush1.msra.mxu0 0.0
    %826 = vmatprep.subr.mxu0 0.0
    %827 = vmatpush1.msra.mxu0 0.0
    %828 = vmatprep.subr.mxu0 0.0
    %829 = vmatpush1.msra.mxu0 0.0
    %830 = vmatprep.subr.mxu0 0.0
    %831 = vmatpush1.msra.mxu0 0.0
    %832 = vmatprep.subr.mxu0 0.0
    %833 = vmatpush1.msra.mxu0 0.0
    %834 = vmatprep.subr.mxu0 0.0
    %835 = vmatpush1.msra.mxu0 0.0
    %836 = vmatprep.subr.mxu0 0.0
    %837 = vmatpush1.msra.mxu0 %v668
    %838 = vmatprep.subr.mxu0 0.0
    %839 = vmatpush1.msra.mxu0 %v667
    %840 = vmatprep.subr.mxu0 0.0
    %841 = vmatpush1.msra.mxu0 %v666
    %842 = vmatprep.subr.mxu0 0.0
    %843 = vmatpush1.msra.mxu0 %v665
    %844 = vmatprep.subr.mxu0 0.0
    %845 = vmatpush2.msra.mxu0 0.0
    %846 = vmatprep.subr.mxu0 0.0
    %847 = vmatpush2.msra.mxu0 0.0
    %848 = vmatprep.subr.mxu0 0.0
    %849 = vmatpush2.msra.mxu0 0.0
    %850 = vmatprep.subr.mxu0 0.0
    %851 = vmatpush2.msra.mxu0 0.0
    %852 = vmatprep.subr.mxu0 0.0
    %853 = vmatpush2.msra.mxu0 0.0
    %854 = vmatprep.subr.mxu0 0.0
    %855 = vmatpush2.msra.mxu0 0.0
    %856 = vmatprep.subr.mxu0 0.0
    %857 = vmatpush2.msra.mxu0 0.0
    %858 = vmatprep.subr.mxu0 0.0
    %859 = vmatpush2.msra.mxu0 0.0
    %860 = vmatprep.subr.mxu0 0.0
    %861 = vmatpush2.msra.mxu0 0.0
    %862 = vmatprep.subr.mxu0 0.0
    %863 = vmatpush2.msra.mxu0 0.0
    %864 = vmatprep.subr.mxu0 0.0
    %865 = vmatpush2.msra.mxu0 0.0
    %866 = vmatprep.subr.mxu0 0.0
    %867 = vmatpush2.msra.mxu0 0.0
    %868 = vmatprep.subr.mxu0 0.0
    %869 = vmatpush2.msra.mxu0 0.0
    %870 = vmatprep.subr.mxu0 0.0
    %871 = vmatpush2.msra.mxu0 0.0
    %872 = vmatprep.subr.mxu0 0.0
    %873 = vmatpush2.msra.mxu0 0.0
    %874 = vmatprep.subr.mxu0 0.0
    %875 = vmatpush2.msra.mxu0 0.0
    %876 = vmatprep.mubr.f32.mxu0 0.0
    %877 = vmatmul.mubr.f32.gmra.mxu0 %v801
    %v878 = vpop.f32.mrf.mxu0
    %v879 = vadd.f32 %v798, %v878
    %v880 = vpop.f32.mrf.mxu0
    %881 = vmatprep.mubr.f32.mxu0 0.0
    %882 = vmatmul.mubr.f32.gmra.mxu0 %v804
    %v883 = vpop.f32.mrf.mxu0
    %v884 = vadd.f32 %v798, %v883
    %v885 = vpop.f32.mrf.mxu0
    %886 = vmatprep.mubr.f32.mxu0 0.0
    %887 = vmatmul.mubr.f32.gmra.mxu0 %v807
    %v888 = vpop.f32.mrf.mxu0
    %v889 = vadd.f32 %v798, %v888
    %v890 = vpop.f32.mrf.mxu0
    %891 = vmatprep.mubr.f32.mxu0 0.0
    %892 = vmatmul.mubr.f32.gmra.mxu0 %v810
    %v893 = vpop.f32.mrf.mxu0
    %v894 = vadd.f32 %v798, %v893
    %v895 = vpop.f32.mrf.mxu0
    %896 = vdwg.mxu0
    %v897 = vmax.f32 %v879, 0.0
    %v898 = vmax.f32 %v884, 0.0
    %v899 = vmax.f32 %v889, 0.0
    %v900 = vmax.f32 %v894, 0.0
    %v902 = vsel %vm94, %v897, 0
    %v905 = vsel %vm94, %v898, 0
    %v908 = vsel %vm94, %v899, 0
    %v911 = vsel %vm94, %v900, 0
    %913 = vmatprep.subr.mxu0 0.0
    %914 = vmatpush1.msra.mxu0 0.0
    %915 = vmatprep.subr.mxu0 0.0
    %916 = vmatpush1.msra.mxu0 0.0
    %917 = vmatprep.subr.mxu0 0.0
    %918 = vmatpush1.msra.mxu0 0.0
    %919 = vmatprep.subr.mxu0 0.0
    %920 = vmatpush1.msra.mxu0 0.0
    %921 = vmatprep.subr.mxu0 0.0
    %922 = vmatpush1.msra.mxu0 0.0
    %923 = vmatprep.subr.mxu0 0.0
    %924 = vmatpush1.msra.mxu0 0.0
    %925 = vmatprep.subr.mxu0 0.0
    %926 = vmatpush1.msra.mxu0 0.0
    %927 = vmatprep.subr.mxu0 0.0
    %928 = vmatpush1.msra.mxu0 0.0
    %929 = vmatprep.subr.mxu0 0.0
    %930 = vmatpush1.msra.mxu0 0.0
    %931 = vmatprep.subr.mxu0 0.0
    %932 = vmatpush1.msra.mxu0 0.0
    %933 = vmatprep.subr.mxu0 0.0
    %934 = vmatpush1.msra.mxu0 0.0
    %935 = vmatprep.subr.mxu0 0.0
    %936 = vmatpush1.msra.mxu0 0.0
    %937 = vmatprep.subr.mxu0 0.0
    %938 = vmatpush1.msra.mxu0 %v673
    %939 = vmatprep.subr.mxu0 0.0
    %940 = vmatpush1.msra.mxu0 %v672
    %941 = vmatprep.subr.mxu0 0.0
    %942 = vmatpush1.msra.mxu0 %v671
    %943 = vmatprep.subr.mxu0 0.0
    %944 = vmatpush1.msra.mxu0 %v670
    %945 = vmatprep.subr.mxu0 0.0
    %946 = vmatpush2.msra.mxu0 0.0
    %947 = vmatprep.subr.mxu0 0.0
    %948 = vmatpush2.msra.mxu0 0.0
    %949 = vmatprep.subr.mxu0 0.0
    %950 = vmatpush2.msra.mxu0 0.0
    %951 = vmatprep.subr.mxu0 0.0
    %952 = vmatpush2.msra.mxu0 0.0
    %953 = vmatprep.subr.mxu0 0.0
    %954 = vmatpush2.msra.mxu0 0.0
    %955 = vmatprep.subr.mxu0 0.0
    %956 = vmatpush2.msra.mxu0 0.0
    %957 = vmatprep.subr.mxu0 0.0
    %958 = vmatpush2.msra.mxu0 0.0
    %959 = vmatprep.subr.mxu0 0.0
    %960 = vmatpush2.msra.mxu0 0.0
    %961 = vmatprep.subr.mxu0 0.0
    %962 = vmatpush2.msra.mxu0 0.0
    %963 = vmatprep.subr.mxu0 0.0
    %964 = vmatpush2.msra.mxu0 0.0
    %965 = vmatprep.subr.mxu0 0.0
    %966 = vmatpush2.msra.mxu0 0.0
    %967 = vmatprep.subr.mxu0 0.0
    %968 = vmatpush2.msra.mxu0 0.0
    %969 = vmatprep.subr.mxu0 0.0
    %970 = vmatpush2.msra.mxu0 0.0
    %971 = vmatprep.subr.mxu0 0.0
    %972 = vmatpush2.msra.mxu0 0.0
    %973 = vmatprep.subr.mxu0 0.0
    %974 = vmatpush2.msra.mxu0 0.0
    %975 = vmatprep.subr.mxu0 0.0
    %976 = vmatpush2.msra.mxu0 0.0
    %977 = vmatprep.mubr.f32.mxu0 0.0
    %978 = vmatmul.mubr.f32.gmra.mxu0 %v902
    %v979 = vpop.f32.mrf.mxu0
    %v980 = vadd.f32 0.0, %v979
    %v981 = vpop.f32.mrf.mxu0
    %982 = vmatprep.mubr.f32.mxu0 0.0
    %983 = vmatmul.mubr.f32.gmra.mxu0 %v905
    %v984 = vpop.f32.mrf.mxu0
    %v985 = vadd.f32 0.0, %v984
    %v986 = vpop.f32.mrf.mxu0
    %987 = vmatprep.mubr.f32.mxu0 0.0
    %988 = vmatmul.mubr.f32.gmra.mxu0 %v908
    %v989 = vpop.f32.mrf.mxu0
    %v990 = vadd.f32 0.0, %v989
    %v991 = vpop.f32.mrf.mxu0
    %992 = vmatprep.mubr.f32.mxu0 0.0
    %993 = vmatmul.mubr.f32.gmra.mxu0 %v911
    %v994 = vpop.f32.mrf.mxu0
    %v995 = vadd.f32 0.0, %v994
    %v996 = vpop.f32.mrf.mxu0
    %997 = vdwg.mxu0
    %v998 = vpack.c.bf16 %v985, %v980
    %v999 = vpack.c.bf16 %v995, %v990
    %v1001 = vlaneseq
    %v1002 = vshrl.u32 %v1001, 7
    %v1003 = vsub.s32 0, %v1002
    %v1004 = vrot.slane %v684, %v1003
    %v1014 = vunpack.c.l.b16 %v42
    %v1015 = vunpack.c.l.b16 %v43
    %v1016 = vunpack.c.l.b16 %v44
    %v1017 = vunpack.c.l.b16 %v45
    %v1018 = vunpack.c.l.b16 %v46
    %v1019 = vunpack.c.l.b16 %v47
    %v1020 = vunpack.c.l.b16 %v48
    %v1021 = vunpack.c.l.b16 %v49
    %v1022 = vpack.c.b16 %v1015, %v1014
    %v1023 = vpack.c.b16 %v1017, %v1016
    %v1024 = vpack.c.b16 %v1019, %v1018
    %v1025 = vpack.c.b16 %v1021, %v1020
    %v1027 = vsel %vm94, %v1022, 0
    %v1030 = vsel %vm94, %v1023, 0
    %v1033 = vsel %vm94, %v1024, 0
    %v1036 = vsel %vm94, %v1025, 0
    %1038 = vmatprep.subr.bf16.mxu0 0
    %1039 = vmatpush1.bf16.msra.mxu0 0
    %1040 = vmatprep.subr.bf16.mxu0 0
    %1041 = vmatpush1.bf16.msra.mxu0 0
    %1042 = vmatprep.subr.bf16.mxu0 0
    %1043 = vmatpush1.bf16.msra.mxu0 0
    %1044 = vmatprep.subr.bf16.mxu0 0
    %1045 = vmatpush1.bf16.msra.mxu0 0
    %1046 = vmatprep.subr.bf16.mxu0 0
    %1047 = vmatpush1.bf16.msra.mxu0 0
    %1048 = vmatprep.subr.bf16.mxu0 0
    %1049 = vmatpush1.bf16.msra.mxu0 0
    %1050 = vmatprep.subr.bf16.mxu0 0
    %1051 = vmatpush1.bf16.msra.mxu0 %v999
    %1052 = vmatprep.subr.bf16.mxu0 0
    %1053 = vmatpush1.bf16.msra.mxu0 %v998
    %1054 = vmatprep.subr.bf16.mxu0 0
    %1055 = vmatpush2.bf16.msra.mxu0 0
    %1056 = vmatprep.subr.bf16.mxu0 0
    %1057 = vmatpush2.bf16.msra.mxu0 0
    %1058 = vmatprep.subr.bf16.mxu0 0
    %1059 = vmatpush2.bf16.msra.mxu0 0
    %1060 = vmatprep.subr.bf16.mxu0 0
    %1061 = vmatpush2.bf16.msra.mxu0 0
    %1062 = vmatprep.subr.bf16.mxu0 0
    %1063 = vmatpush2.bf16.msra.mxu0 0
    %1064 = vmatprep.subr.bf16.mxu0 0
    %1065 = vmatpush2.bf16.msra.mxu0 0
    %1066 = vmatprep.subr.bf16.mxu0 0
    %1067 = vmatpush2.bf16.msra.mxu0 0
    %1068 = vmatprep.subr.bf16.mxu0 0
    %1069 = vmatpush2.bf16.msra.mxu0 0
    %1070 = vmatprep.mubr.bf16.mxu0 0
    %1071 = vmatmul.mubr.bf16.gmra.mxu0 %v1027
    %v1072 = vpop.f32.mrf.mxu0
    %v1073 = vadd.f32 %v1004, %v1072
    %v1074 = vpop.f32.mrf.mxu0
    %v1075 = vpop.f32.mrf.mxu0
    %v1076 = vadd.f32 %v1004, %v1075
    %v1077 = vpop.f32.mrf.mxu0
    %1078 = vmatprep.mubr.bf16.mxu0 0
    %1079 = vmatmul.mubr.bf16.gmra.mxu0 %v1030
    %v1080 = vpop.f32.mrf.mxu0
    %v1081 = vadd.f32 %v1004, %v1080
    %v1082 = vpop.f32.mrf.mxu0
    %v1083 = vpop.f32.mrf.mxu0
    %v1084 = vadd.f32 %v1004, %v1083
    %v1085 = vpop.f32.mrf.mxu0
    %1086 = vmatprep.mubr.bf16.mxu0 0
    %1087 = vmatmul.mubr.bf16.gmra.mxu0 %v1033
    %v1088 = vpop.f32.mrf.mxu0
    %v1089 = vadd.f32 %v1004, %v1088
    %v1090 = vpop.f32.mrf.mxu0
    %v1091 = vpop.f32.mrf.mxu0
    %v1092 = vadd.f32 %v1004, %v1091
    %v1093 = vpop.f32.mrf.mxu0
    %1094 = vmatprep.mubr.bf16.mxu0 0
    %1095 = vmatmul.mubr.bf16.gmra.mxu0 %v1036
    %v1096 = vpop.f32.mrf.mxu0
    %v1097 = vadd.f32 %v1004, %v1096
    %v1098 = vpop.f32.mrf.mxu0
    %v1099 = vpop.f32.mrf.mxu0
    %v1100 = vadd.f32 %v1004, %v1099
    %v1101 = vpop.f32.mrf.mxu0
    %1102 = vdwg.mxu0
    %v1103 = vmax.f32 %v1073, 0.0
    %v1104 = vmax.f32 %v1076, 0.0
    %v1105 = vmax.f32 %v1081, 0.0
    %v1106 = vmax.f32 %v1084, 0.0
    %v1107 = vmax.f32 %v1089, 0.0
    %v1108 = vmax.f32 %v1092, 0.0
    %v1109 = vmax.f32 %v1097, 0.0
    %v1110 = vmax.f32 %v1100, 0.0
    %v1112 = vlaneseq
    %v1113 = vshrl.u32 %v1112, 7
    %v1114 = vsub.s32 0, %v1113
    %v1115 = vrot.slane %v686, %v1114
    %v1118 = vsel %vm94, %v1103, 0
    %v1121 = vsel %vm94, %v1104, 0
    %v1124 = vsel %vm94, %v1105, 0
    %v1127 = vsel %vm94, %v1106, 0
    %v1130 = vsel %vm94, %v1107, 0
    %v1133 = vsel %vm94, %v1108, 0
    %v1136 = vsel %vm94, %v1109, 0
    %v1139 = vsel %vm94, %v1110, 0
    %1141 = vmatprep.subr.mxu0 0.0
    %1142 = vmatpush1.msra.mxu0 0.0
    %1143 = vmatprep.subr.mxu0 0.0
    %1144 = vmatpush1.msra.mxu0 0.0
    %1145 = vmatprep.subr.mxu0 0.0
    %1146 = vmatpush1.msra.mxu0 0.0
    %1147 = vmatprep.subr.mxu0 0.0
    %1148 = vmatpush1.msra.mxu0 0.0
    %1149 = vmatprep.subr.mxu0 0.0
    %1150 = vmatpush1.msra.mxu0 0.0
    %1151 = vmatprep.subr.mxu0 0.0
    %1152 = vmatpush1.msra.mxu0 0.0
    %1153 = vmatprep.subr.mxu0 0.0
    %1154 = vmatpush1.msra.mxu0 0.0
    %1155 = vmatprep.subr.mxu0 0.0
    %1156 = vmatpush1.msra.mxu0 0.0
    %1157 = vmatprep.subr.mxu0 0.0
    %1158 = vmatpush1.msra.mxu0 0.0
    %1159 = vmatprep.subr.mxu0 0.0
    %1160 = vmatpush1.msra.mxu0 0.0
    %1161 = vmatprep.subr.mxu0 0.0
    %1162 = vmatpush1.msra.mxu0 0.0
    %1163 = vmatprep.subr.mxu0 0.0
    %1164 = vmatpush1.msra.mxu0 0.0
    %1165 = vmatprep.subr.mxu0 0.0
    %1166 = vmatpush1.msra.mxu0 %v678
    %1167 = vmatprep.subr.mxu0 0.0
    %1168 = vmatpush1.msra.mxu0 %v677
    %1169 = vmatprep.subr.mxu0 0.0
    %1170 = vmatpush1.msra.mxu0 %v676
    %1171 = vmatprep.subr.mxu0 0.0
    %1172 = vmatpush1.msra.mxu0 %v675
    %1173 = vmatprep.subr.mxu0 0.0
    %1174 = vmatpush2.msra.mxu0 0.0
    %1175 = vmatprep.subr.mxu0 0.0
    %1176 = vmatpush2.msra.mxu0 0.0
    %1177 = vmatprep.subr.mxu0 0.0
    %1178 = vmatpush2.msra.mxu0 0.0
    %1179 = vmatprep.subr.mxu0 0.0
    %1180 = vmatpush2.msra.mxu0 0.0
    %1181 = vmatprep.subr.mxu0 0.0
    %1182 = vmatpush2.msra.mxu0 0.0
    %1183 = vmatprep.subr.mxu0 0.0
    %1184 = vmatpush2.msra.mxu0 0.0
    %1185 = vmatprep.subr.mxu0 0.0
    %1186 = vmatpush2.msra.mxu0 0.0
    %1187 = vmatprep.subr.mxu0 0.0
    %1188 = vmatpush2.msra.mxu0 0.0
    %1189 = vmatprep.subr.mxu0 0.0
    %1190 = vmatpush2.msra.mxu0 0.0
    %1191 = vmatprep.subr.mxu0 0.0
    %1192 = vmatpush2.msra.mxu0 0.0
    %1193 = vmatprep.subr.mxu0 0.0
    %1194 = vmatpush2.msra.mxu0 0.0
    %1195 = vmatprep.subr.mxu0 0.0
    %1196 = vmatpush2.msra.mxu0 0.0
    %1197 = vmatprep.subr.mxu0 0.0
    %1198 = vmatpush2.msra.mxu0 0.0
    %1199 = vmatprep.subr.mxu0 0.0
    %1200 = vmatpush2.msra.mxu0 0.0
    %1201 = vmatprep.subr.mxu0 0.0
    %1202 = vmatpush2.msra.mxu0 0.0
    %1203 = vmatprep.subr.mxu0 0.0
    %1204 = vmatpush2.msra.mxu0 0.0
    %1205 = vmatprep.mubr.f32.mxu0 0.0
    %1206 = vmatmul.mubr.f32.gmra.mxu0 %v1118
    %v1207 = vpop.f32.mrf.mxu0
    %v1208 = vadd.f32 %v1115, %v1207
    %v1209 = vpop.f32.mrf.mxu0
    %1210 = vmatprep.mubr.f32.mxu0 0.0
    %1211 = vmatmul.mubr.f32.gmra.mxu0 %v1121
    %v1212 = vpop.f32.mrf.mxu0
    %v1213 = vadd.f32 %v1115, %v1212
    %v1214 = vpop.f32.mrf.mxu0
    %1215 = vmatprep.mubr.f32.mxu0 0.0
    %1216 = vmatmul.mubr.f32.gmra.mxu0 %v1124
    %v1217 = vpop.f32.mrf.mxu0
    %v1218 = vadd.f32 %v1115, %v1217
    %v1219 = vpop.f32.mrf.mxu0
    %1220 = vmatprep.mubr.f32.mxu0 0.0
    %1221 = vmatmul.mubr.f32.gmra.mxu0 %v1127
    %v1222 = vpop.f32.mrf.mxu0
    %v1223 = vadd.f32 %v1115, %v1222
    %v1224 = vpop.f32.mrf.mxu0
    %1225 = vmatprep.mubr.f32.mxu0 0.0
    %1226 = vmatmul.mubr.f32.gmra.mxu0 %v1130
    %v1227 = vpop.f32.mrf.mxu0
    %v1228 = vadd.f32 %v1115, %v1227
    %v1229 = vpop.f32.mrf.mxu0
    %1230 = vmatprep.mubr.f32.mxu0 0.0
    %1231 = vmatmul.mubr.f32.gmra.mxu0 %v1133
    %v1232 = vpop.f32.mrf.mxu0
    %v1233 = vadd.f32 %v1115, %v1232
    %v1234 = vpop.f32.mrf.mxu0
    %1235 = vmatprep.mubr.f32.mxu0 0.0
    %1236 = vmatmul.mubr.f32.gmra.mxu0 %v1136
    %v1237 = vpop.f32.mrf.mxu0
    %v1238 = vadd.f32 %v1115, %v1237
    %v1239 = vpop.f32.mrf.mxu0
    %1240 = vmatprep.mubr.f32.mxu0 0.0
    %1241 = vmatmul.mubr.f32.gmra.mxu0 %v1139
    %v1242 = vpop.f32.mrf.mxu0
    %v1243 = vadd.f32 %v1115, %v1242
    %v1244 = vpop.f32.mrf.mxu0
    %1245 = vdwg.mxu0
    %v1246 = vmax.f32 %v1208, 0.0
    %v1247 = vmax.f32 %v1213, 0.0
    %v1248 = vmax.f32 %v1218, 0.0
    %v1249 = vmax.f32 %v1223, 0.0
    %v1250 = vmax.f32 %v1228, 0.0
    %v1251 = vmax.f32 %v1233, 0.0
    %v1252 = vmax.f32 %v1238, 0.0
    %v1253 = vmax.f32 %v1243, 0.0
    %s1254 = scalar_lea.vmem [#allocation2], 256
    %v1255 = vld [vmem:[%s1254] sm:$0xff]
    %v1256 = vld [vmem:[%s1254 + $0x8] sm:$0xff]
    %v1257 = vld [vmem:[%s1254 + $0x10] sm:$0xff]
    %v1258 = vld [vmem:[%s1254 + $0x18] sm:$0xff]
    %s1259 = scalar_lea.vmem [#allocation2], 288
    %v1260 = vld [vmem:[%s1259] sm:$0xff]
    %v1261 = vld [vmem:[%s1259 + $0x8] sm:$0xff]
    %v1262 = vld [vmem:[%s1259 + $0x10] sm:$0xff]
    %v1263 = vld [vmem:[%s1259 + $0x18] sm:$0xff]
    %s1264 = scalar_lea.vmem [#allocation2], 320
    %v1265 = vld [vmem:[%s1264] sm:$0xff]
    %v1266 = vld [vmem:[%s1264 + $0x8] sm:$0xff]
    %v1267 = vld [vmem:[%s1264 + $0x10] sm:$0xff]
    %v1268 = vld [vmem:[%s1264 + $0x18] sm:$0xff]
    %s1269 = scalar_lea.vmem [#allocation2], 352
    %v1270 = vld [vmem:[%s1269] sm:$0xff]
    %v1271 = vld [vmem:[%s1269 + $0x8] sm:$0xff]
    %v1272 = vld [vmem:[%s1269 + $0x10] sm:$0xff]
    %v1273 = vld [vmem:[%s1269 + $0x18] sm:$0xff]
    %s1274 = scalar_lea.vmem %s4, 8
    %v1275 = vld [vmem:[%s1274] sm:$0x1]
    %s1276 = scalar_lea.vmem %s4, 9
    %v1277 = vld [vmem:[%s1276] sm:$0x1]
    %s1278 = scalar_lea.vmem %s4, 10
    %v1279 = vld [vmem:[%s1278] sm:$0x1]
    %s1280 = scalar_lea.vmem %s4, 11
    %v1281 = vld [vmem:[%s1280] sm:$0x1]
    %v1283 = vlaneseq
    %v1284 = vshrl.u32 %v1283, 7
    %v1285 = vsub.s32 0, %v1284
    %v1286 = vrot.slane %v1275, %v1285
    %v1289 = vsel %vm94, %v1246, 0
    %v1292 = vsel %vm94, %v1247, 0
    %v1295 = vsel %vm94, %v1248, 0
    %v1298 = vsel %vm94, %v1249, 0
    %v1301 = vsel %vm94, %v1250, 0
    %v1304 = vsel %vm94, %v1251, 0
    %v1307 = vsel %vm94, %v1252, 0
    %v1310 = vsel %vm94, %v1253, 0
    %1312 = vmatprep.subr.mxu0 0.0
    %1313 = vmatpush1.msra.mxu0 0.0
    %1314 = vmatprep.subr.mxu0 0.0
    %1315 = vmatpush1.msra.mxu0 0.0
    %1316 = vmatprep.subr.mxu0 0.0
    %1317 = vmatpush1.msra.mxu0 0.0
    %1318 = vmatprep.subr.mxu0 0.0
    %1319 = vmatpush1.msra.mxu0 0.0
    %1320 = vmatprep.subr.mxu0 0.0
    %1321 = vmatpush1.msra.mxu0 0.0
    %1322 = vmatprep.subr.mxu0 0.0
    %1323 = vmatpush1.msra.mxu0 0.0
    %1324 = vmatprep.subr.mxu0 0.0
    %1325 = vmatpush1.msra.mxu0 0.0
    %1326 = vmatprep.subr.mxu0 0.0
    %1327 = vmatpush1.msra.mxu0 0.0
    %1328 = vmatprep.subr.mxu0 0.0
    %1329 = vmatpush1.msra.mxu0 0.0
    %1330 = vmatprep.subr.mxu0 0.0
    %1331 = vmatpush1.msra.mxu0 0.0
    %1332 = vmatprep.subr.mxu0 0.0
    %1333 = vmatpush1.msra.mxu0 0.0
    %1334 = vmatprep.subr.mxu0 0.0
    %1335 = vmatpush1.msra.mxu0 0.0
    %1336 = vmatprep.subr.mxu0 0.0
    %1337 = vmatpush1.msra.mxu0 %v1258
    %1338 = vmatprep.subr.mxu0 0.0
    %1339 = vmatpush1.msra.mxu0 %v1257
    %1340 = vmatprep.subr.mxu0 0.0
    %1341 = vmatpush1.msra.mxu0 %v1256
    %1342 = vmatprep.subr.mxu0 0.0
    %1343 = vmatpush1.msra.mxu0 %v1255
    %1344 = vmatprep.subr.mxu0 0.0
    %1345 = vmatpush2.msra.mxu0 0.0
    %1346 = vmatprep.subr.mxu0 0.0
    %1347 = vmatpush2.msra.mxu0 0.0
    %1348 = vmatprep.subr.mxu0 0.0
    %1349 = vmatpush2.msra.mxu0 0.0
    %1350 = vmatprep.subr.mxu0 0.0
    %1351 = vmatpush2.msra.mxu0 0.0
    %1352 = vmatprep.subr.mxu0 0.0
    %1353 = vmatpush2.msra.mxu0 0.0
    %1354 = vmatprep.subr.mxu0 0.0
    %1355 = vmatpush2.msra.mxu0 0.0
    %1356 = vmatprep.subr.mxu0 0.0
    %1357 = vmatpush2.msra.mxu0 0.0
    %1358 = vmatprep.subr.mxu0 0.0
    %1359 = vmatpush2.msra.mxu0 0.0
    %1360 = vmatprep.subr.mxu0 0.0
    %1361 = vmatpush2.msra.mxu0 0.0
    %1362 = vmatprep.subr.mxu0 0.0
    %1363 = vmatpush2.msra.mxu0 0.0
    %1364 = vmatprep.subr.mxu0 0.0
    %1365 = vmatpush2.msra.mxu0 0.0
    %1366 = vmatprep.subr.mxu0 0.0
    %1367 = vmatpush2.msra.mxu0 0.0
    %1368 = vmatprep.subr.mxu0 0.0
    %1369 = vmatpush2.msra.mxu0 0.0
    %1370 = vmatprep.subr.mxu0 0.0
    %1371 = vmatpush2.msra.mxu0 0.0
    %1372 = vmatprep.subr.mxu0 0.0
    %1373 = vmatpush2.msra.mxu0 0.0
    %1374 = vmatprep.subr.mxu0 0.0
    %1375 = vmatpush2.msra.mxu0 0.0
    %1376 = vmatprep.mubr.f32.mxu0 0.0
    %1377 = vmatmul.mubr.f32.gmra.mxu0 %v1289
    %v1378 = vpop.f32.mrf.mxu0
    %v1379 = vadd.f32 %v1286, %v1378
    %v1380 = vpop.f32.mrf.mxu0
    %1381 = vmatprep.mubr.f32.mxu0 0.0
    %1382 = vmatmul.mubr.f32.gmra.mxu0 %v1292
    %v1383 = vpop.f32.mrf.mxu0
    %v1384 = vadd.f32 %v1286, %v1383
    %v1385 = vpop.f32.mrf.mxu0
    %1386 = vmatprep.mubr.f32.mxu0 0.0
    %1387 = vmatmul.mubr.f32.gmra.mxu0 %v1295
    %v1388 = vpop.f32.mrf.mxu0
    %v1389 = vadd.f32 %v1286, %v1388
    %v1390 = vpop.f32.mrf.mxu0
    %1391 = vmatprep.mubr.f32.mxu0 0.0
    %1392 = vmatmul.mubr.f32.gmra.mxu0 %v1298
    %v1393 = vpop.f32.mrf.mxu0
    %v1394 = vadd.f32 %v1286, %v1393
    %v1395 = vpop.f32.mrf.mxu0
    %1396 = vmatprep.mubr.f32.mxu0 0.0
    %1397 = vmatmul.mubr.f32.gmra.mxu0 %v1301
    %v1398 = vpop.f32.mrf.mxu0
    %v1399 = vadd.f32 %v1286, %v1398
    %v1400 = vpop.f32.mrf.mxu0
    %1401 = vmatprep.mubr.f32.mxu0 0.0
    %1402 = vmatmul.mubr.f32.gmra.mxu0 %v1304
    %v1403 = vpop.f32.mrf.mxu0
    %v1404 = vadd.f32 %v1286, %v1403
    %v1405 = vpop.f32.mrf.mxu0
    %1406 = vmatprep.mubr.f32.mxu0 0.0
    %1407 = vmatmul.mubr.f32.gmra.mxu0 %v1307
    %v1408 = vpop.f32.mrf.mxu0
    %v1409 = vadd.f32 %v1286, %v1408
    %v1410 = vpop.f32.mrf.mxu0
    %1411 = vmatprep.mubr.f32.mxu0 0.0
    %1412 = vmatmul.mubr.f32.gmra.mxu0 %v1310
    %v1413 = vpop.f32.mrf.mxu0
    %v1414 = vadd.f32 %v1286, %v1413
    %v1415 = vpop.f32.mrf.mxu0
    %1416 = vdwg.mxu0
    %v1417 = vmax.f32 %v1379, 0.0
    %v1418 = vmax.f32 %v1384, 0.0
    %v1419 = vmax.f32 %v1389, 0.0
    %v1420 = vmax.f32 %v1394, 0.0
    %v1421 = vmax.f32 %v1399, 0.0
    %v1422 = vmax.f32 %v1404, 0.0
    %v1423 = vmax.f32 %v1409, 0.0
    %v1424 = vmax.f32 %v1414, 0.0
    %v1426 = vlaneseq
    %v1427 = vshrl.u32 %v1426, 7
    %v1428 = vsub.s32 0, %v1427
    %v1429 = vrot.slane %v1277, %v1428
    %v1432 = vsel %vm94, %v1417, 0
    %v1435 = vsel %vm94, %v1418, 0
    %v1438 = vsel %vm94, %v1419, 0
    %v1441 = vsel %vm94, %v1420, 0
    %v1444 = vsel %vm94, %v1421, 0
    %v1447 = vsel %vm94, %v1422, 0
    %v1450 = vsel %vm94, %v1423, 0
    %v1453 = vsel %vm94, %v1424, 0
    %1455 = vmatprep.subr.mxu0 0.0
    %1456 = vmatpush1.msra.mxu0 0.0
    %1457 = vmatprep.subr.mxu0 0.0
    %1458 = vmatpush1.msra.mxu0 0.0
    %1459 = vmatprep.subr.mxu0 0.0
    %1460 = vmatpush1.msra.mxu0 0.0
    %1461 = vmatprep.subr.mxu0 0.0
    %1462 = vmatpush1.msra.mxu0 0.0
    %1463 = vmatprep.subr.mxu0 0.0
    %1464 = vmatpush1.msra.mxu0 0.0
    %1465 = vmatprep.subr.mxu0 0.0
    %1466 = vmatpush1.msra.mxu0 0.0
    %1467 = vmatprep.subr.mxu0 0.0
    %1468 = vmatpush1.msra.mxu0 0.0
    %1469 = vmatprep.subr.mxu0 0.0
    %1470 = vmatpush1.msra.mxu0 0.0
    %1471 = vmatprep.subr.mxu0 0.0
    %1472 = vmatpush1.msra.mxu0 0.0
    %1473 = vmatprep.subr.mxu0 0.0
    %1474 = vmatpush1.msra.mxu0 0.0
    %1475 = vmatprep.subr.mxu0 0.0
    %1476 = vmatpush1.msra.mxu0 0.0
    %1477 = vmatprep.subr.mxu0 0.0
    %1478 = vmatpush1.msra.mxu0 0.0
    %1479 = vmatprep.subr.mxu0 0.0
    %1480 = vmatpush1.msra.mxu0 %v1263
    %1481 = vmatprep.subr.mxu0 0.0
    %1482 = vmatpush1.msra.mxu0 %v1262
    %1483 = vmatprep.subr.mxu0 0.0
    %1484 = vmatpush1.msra.mxu0 %v1261
    %1485 = vmatprep.subr.mxu0 0.0
    %1486 = vmatpush1.msra.mxu0 %v1260
    %1487 = vmatprep.subr.mxu0 0.0
    %1488 = vmatpush2.msra.mxu0 0.0
    %1489 = vmatprep.subr.mxu0 0.0
    %1490 = vmatpush2.msra.mxu0 0.0
    %1491 = vmatprep.subr.mxu0 0.0
    %1492 = vmatpush2.msra.mxu0 0.0
    %1493 = vmatprep.subr.mxu0 0.0
    %1494 = vmatpush2.msra.mxu0 0.0
    %1495 = vmatprep.subr.mxu0 0.0
    %1496 = vmatpush2.msra.mxu0 0.0
    %1497 = vmatprep.subr.mxu0 0.0
    %1498 = vmatpush2.msra.mxu0 0.0
    %1499 = vmatprep.subr.mxu0 0.0
    %1500 = vmatpush2.msra.mxu0 0.0
    %1501 = vmatprep.subr.mxu0 0.0
    %1502 = vmatpush2.msra.mxu0 0.0
    %1503 = vmatprep.subr.mxu0 0.0
    %1504 = vmatpush2.msra.mxu0 0.0
    %1505 = vmatprep.subr.mxu0 0.0
    %1506 = vmatpush2.msra.mxu0 0.0
    %1507 = vmatprep.subr.mxu0 0.0
    %1508 = vmatpush2.msra.mxu0 0.0
    %1509 = vmatprep.subr.mxu0 0.0
    %1510 = vmatpush2.msra.mxu0 0.0
    %1511 = vmatprep.subr.mxu0 0.0
    %1512 = vmatpush2.msra.mxu0 0.0
    %1513 = vmatprep.subr.mxu0 0.0
    %1514 = vmatpush2.msra.mxu0 0.0
    %1515 = vmatprep.subr.mxu0 0.0
    %1516 = vmatpush2.msra.mxu0 0.0
    %1517 = vmatprep.subr.mxu0 0.0
    %1518 = vmatpush2.msra.mxu0 0.0
    %1519 = vmatprep.mubr.f32.mxu0 0.0
    %1520 = vmatmul.mubr.f32.gmra.mxu0 %v1432
    %v1521 = vpop.f32.mrf.mxu0
    %v1522 = vadd.f32 %v1429, %v1521
    %v1523 = vpop.f32.mrf.mxu0
    %1524 = vmatprep.mubr.f32.mxu0 0.0
    %1525 = vmatmul.mubr.f32.gmra.mxu0 %v1435
    %v1526 = vpop.f32.mrf.mxu0
    %v1527 = vadd.f32 %v1429, %v1526
    %v1528 = vpop.f32.mrf.mxu0
    %1529 = vmatprep.mubr.f32.mxu0 0.0
    %1530 = vmatmul.mubr.f32.gmra.mxu0 %v1438
    %v1531 = vpop.f32.mrf.mxu0
    %v1532 = vadd.f32 %v1429, %v1531
    %v1533 = vpop.f32.mrf.mxu0
    %1534 = vmatprep.mubr.f32.mxu0 0.0
    %1535 = vmatmul.mubr.f32.gmra.mxu0 %v1441
    %v1536 = vpop.f32.mrf.mxu0
    %v1537 = vadd.f32 %v1429, %v1536
    %v1538 = vpop.f32.mrf.mxu0
    %1539 = vmatprep.mubr.f32.mxu0 0.0
    %1540 = vmatmul.mubr.f32.gmra.mxu0 %v1444
    %v1541 = vpop.f32.mrf.mxu0
    %v1542 = vadd.f32 %v1429, %v1541
    %v1543 = vpop.f32.mrf.mxu0
    %1544 = vmatprep.mubr.f32.mxu0 0.0
    %1545 = vmatmul.mubr.f32.gmra.mxu0 %v1447
    %v1546 = vpop.f32.mrf.mxu0
    %v1547 = vadd.f32 %v1429, %v1546
    %v1548 = vpop.f32.mrf.mxu0
    %1549 = vmatprep.mubr.f32.mxu0 0.0
    %1550 = vmatmul.mubr.f32.gmra.mxu0 %v1450
    %v1551 = vpop.f32.mrf.mxu0
    %v1552 = vadd.f32 %v1429, %v1551
    %v1553 = vpop.f32.mrf.mxu0
    %1554 = vmatprep.mubr.f32.mxu0 0.0
    %1555 = vmatmul.mubr.f32.gmra.mxu0 %v1453
    %v1556 = vpop.f32.mrf.mxu0
    %v1557 = vadd.f32 %v1429, %v1556
    %v1558 = vpop.f32.mrf.mxu0
    %1559 = vdwg.mxu0
    %v1560 = vmax.f32 %v1522, 0.0
    %v1561 = vmax.f32 %v1527, 0.0
    %v1562 = vmax.f32 %v1532, 0.0
    %v1563 = vmax.f32 %v1537, 0.0
    %v1564 = vmax.f32 %v1542, 0.0
    %v1565 = vmax.f32 %v1547, 0.0
    %v1566 = vmax.f32 %v1552, 0.0
    %v1567 = vmax.f32 %v1557, 0.0
    %v1568 = vpack.c.bf16 %v1561, %v1560
    %v1569 = vpack.c.bf16 %v1563, %v1562
    %v1570 = vpack.c.bf16 %v1565, %v1564
    %v1571 = vpack.c.bf16 %v1567, %v1566
    %1572 = vmatprep.subr.bf16.mxu0 0
    %1573 = vmatpush1.bf16.msra.mxu0 0
    %1574 = vmatprep.subr.bf16.mxu0 0
    %1575 = vmatpush1.bf16.msra.mxu0 0
    %1576 = vmatprep.subr.bf16.mxu0 0
    %1577 = vmatpush1.bf16.msra.mxu0 0
    %1578 = vmatprep.subr.bf16.mxu0 0
    %1579 = vmatpush1.bf16.msra.mxu0 0
    %1580 = vmatprep.subr.bf16.mxu0 0
    %1581 = vmatpush1.bf16.msra.mxu0 %v1571
    %1582 = vmatprep.subr.bf16.mxu0 0
    %1583 = vmatpush1.bf16.msra.mxu0 %v1570
    %1584 = vmatprep.subr.bf16.mxu0 0
    %1585 = vmatpush1.bf16.msra.mxu0 %v1569
    %1586 = vmatprep.subr.bf16.mxu0 0
    %1587 = vmatpush1.bf16.msra.mxu0 %v1568
    %1588 = vmatprep.subr.bf16.mxu0 0
    %1589 = vmatpush2.bf16.msra.mxu0 0
    %1590 = vmatprep.subr.bf16.mxu0 0
    %1591 = vmatpush2.bf16.msra.mxu0 0
    %1592 = vmatprep.subr.bf16.mxu0 0
    %1593 = vmatpush2.bf16.msra.mxu0 0
    %1594 = vmatprep.subr.bf16.mxu0 0
    %1595 = vmatpush2.bf16.msra.mxu0 0
    %1596 = vmatprep.subr.bf16.mxu0 0
    %1597 = vmatpush2.bf16.msra.mxu0 0
    %1598 = vmatprep.subr.bf16.mxu0 0
    %1599 = vmatpush2.bf16.msra.mxu0 0
    %1600 = vmatprep.subr.bf16.mxu0 0
    %1601 = vmatpush2.bf16.msra.mxu0 0
    %1602 = vmatprep.subr.bf16.mxu0 0
    %1603 = vmatpush2.bf16.msra.mxu0 0
    %1604 = vmatprep.mubr.bf16.mxu0 0
    %1605 = vmatmul.mubr.bf16.gmra.mxu0 %v391
    %v1606 = vpop.f32.mrf.mxu0
    %v1607 = vadd.f32 0.0, %v1606
    %v1608 = vpop.f32.mrf.mxu0
    %v1609 = vpop.f32.mrf.mxu0
    %v1610 = vadd.f32 0.0, %v1609
    %v1611 = vpop.f32.mrf.mxu0
    %1612 = vmatprep.mubr.bf16.mxu0 0
    %1613 = vmatmul.mubr.bf16.gmra.mxu0 %v394
    %v1614 = vpop.f32.mrf.mxu0
    %v1615 = vadd.f32 0.0, %v1614
    %v1616 = vpop.f32.mrf.mxu0
    %v1617 = vpop.f32.mrf.mxu0
    %v1618 = vadd.f32 0.0, %v1617
    %v1619 = vpop.f32.mrf.mxu0
    %1620 = vdwg.mxu0
    %v1622 = vlaneseq
    %v1623 = vshrl.u32 %v1622, 7
    %v1624 = vsub.s32 0, %v1623
    %v1625 = vrot.slane %v1279, %v1624
    %v1628 = vsel %vm94, %v1607, 0
    %v1631 = vsel %vm94, %v1610, 0
    %v1634 = vsel %vm94, %v1615, 0
    %v1637 = vsel %vm94, %v1618, 0
    %1639 = vmatprep.subr.mxu0 0.0
    %1640 = vmatpush1.msra.mxu0 0.0
    %1641 = vmatprep.subr.mxu0 0.0
    %1642 = vmatpush1.msra.mxu0 0.0
    %1643 = vmatprep.subr.mxu0 0.0
    %1644 = vmatpush1.msra.mxu0 0.0
    %1645 = vmatprep.subr.mxu0 0.0
    %1646 = vmatpush1.msra.mxu0 0.0
    %1647 = vmatprep.subr.mxu0 0.0
    %1648 = vmatpush1.msra.mxu0 0.0
    %1649 = vmatprep.subr.mxu0 0.0
    %1650 = vmatpush1.msra.mxu0 0.0
    %1651 = vmatprep.subr.mxu0 0.0
    %1652 = vmatpush1.msra.mxu0 0.0
    %1653 = vmatprep.subr.mxu0 0.0
    %1654 = vmatpush1.msra.mxu0 0.0
    %1655 = vmatprep.subr.mxu0 0.0
    %1656 = vmatpush1.msra.mxu0 0.0
    %1657 = vmatprep.subr.mxu0 0.0
    %1658 = vmatpush1.msra.mxu0 0.0
    %1659 = vmatprep.subr.mxu0 0.0
    %1660 = vmatpush1.msra.mxu0 0.0
    %1661 = vmatprep.subr.mxu0 0.0
    %1662 = vmatpush1.msra.mxu0 0.0
    %1663 = vmatprep.subr.mxu0 0.0
    %1664 = vmatpush1.msra.mxu0 %v1268
    %1665 = vmatprep.subr.mxu0 0.0
    %1666 = vmatpush1.msra.mxu0 %v1267
    %1667 = vmatprep.subr.mxu0 0.0
    %1668 = vmatpush1.msra.mxu0 %v1266
    %1669 = vmatprep.subr.mxu0 0.0
    %1670 = vmatpush1.msra.mxu0 %v1265
    %1671 = vmatprep.subr.mxu0 0.0
    %1672 = vmatpush2.msra.mxu0 0.0
    %1673 = vmatprep.subr.mxu0 0.0
    %1674 = vmatpush2.msra.mxu0 0.0
    %1675 = vmatprep.subr.mxu0 0.0
    %1676 = vmatpush2.msra.mxu0 0.0
    %1677 = vmatprep.subr.mxu0 0.0
    %1678 = vmatpush2.msra.mxu0 0.0
    %1679 = vmatprep.subr.mxu0 0.0
    %1680 = vmatpush2.msra.mxu0 0.0
    %1681 = vmatprep.subr.mxu0 0.0
    %1682 = vmatpush2.msra.mxu0 0.0
    %1683 = vmatprep.subr.mxu0 0.0
    %1684 = vmatpush2.msra.mxu0 0.0
    %1685 = vmatprep.subr.mxu0 0.0
    %1686 = vmatpush2.msra.mxu0 0.0
    %1687 = vmatprep.subr.mxu0 0.0
    %1688 = vmatpush2.msra.mxu0 0.0
    %1689 = vmatprep.subr.mxu0 0.0
    %1690 = vmatpush2.msra.mxu0 0.0
    %1691 = vmatprep.subr.mxu0 0.0
    %1692 = vmatpush2.msra.mxu0 0.0
    %1693 = vmatprep.subr.mxu0 0.0
    %1694 = vmatpush2.msra.mxu0 0.0
    %1695 = vmatprep.subr.mxu0 0.0
    %1696 = vmatpush2.msra.mxu0 0.0
    %1697 = vmatprep.subr.mxu0 0.0
    %1698 = vmatpush2.msra.mxu0 0.0
    %1699 = vmatprep.subr.mxu0 0.0
    %1700 = vmatpush2.msra.mxu0 0.0
    %1701 = vmatprep.subr.mxu0 0.0
    %1702 = vmatpush2.msra.mxu0 0.0
    %1703 = vmatprep.mubr.f32.mxu0 0.0
    %1704 = vmatmul.mubr.f32.gmra.mxu0 %v1628
    %v1705 = vpop.f32.mrf.mxu0
    %v1706 = vadd.f32 %v1625, %v1705
    %v1707 = vpop.f32.mrf.mxu0
    %1708 = vmatprep.mubr.f32.mxu0 0.0
    %1709 = vmatmul.mubr.f32.gmra.mxu0 %v1631
    %v1710 = vpop.f32.mrf.mxu0
    %v1711 = vadd.f32 %v1625, %v1710
    %v1712 = vpop.f32.mrf.mxu0
    %1713 = vmatprep.mubr.f32.mxu0 0.0
    %1714 = vmatmul.mubr.f32.gmra.mxu0 %v1634
    %v1715 = vpop.f32.mrf.mxu0
    %v1716 = vadd.f32 %v1625, %v1715
    %v1717 = vpop.f32.mrf.mxu0
    %1718 = vmatprep.mubr.f32.mxu0 0.0
    %1719 = vmatmul.mubr.f32.gmra.mxu0 %v1637
    %v1720 = vpop.f32.mrf.mxu0
    %v1721 = vadd.f32 %v1625, %v1720
    %v1722 = vpop.f32.mrf.mxu0
    %1723 = vdwg.mxu0
    %v1724 = vmax.f32 %v1706, 0.0
    %v1725 = vmax.f32 %v1711, 0.0
    %v1726 = vmax.f32 %v1716, 0.0
    %v1727 = vmax.f32 %v1721, 0.0
    %v1729 = vlaneseq
    %v1730 = vshrl.u32 %v1729, 7
    %v1731 = vsub.s32 0, %v1730
    %v1732 = vrot.slane %v1281, %v1731
    %v1735 = vsel %vm94, %v1724, 0
    %v1738 = vsel %vm94, %v1725, 0
    %v1741 = vsel %vm94, %v1726, 0
    %v1744 = vsel %vm94, %v1727, 0
    %1746 = vmatprep.subr.mxu0 0.0
    %1747 = vmatpush1.msra.mxu0 0.0
    %1748 = vmatprep.subr.mxu0 0.0
    %1749 = vmatpush1.msra.mxu0 0.0
    %1750 = vmatprep.subr.mxu0 0.0
    %1751 = vmatpush1.msra.mxu0 0.0
    %1752 = vmatprep.subr.mxu0 0.0
    %1753 = vmatpush1.msra.mxu0 0.0
    %1754 = vmatprep.subr.mxu0 0.0
    %1755 = vmatpush1.msra.mxu0 0.0
    %1756 = vmatprep.subr.mxu0 0.0
    %1757 = vmatpush1.msra.mxu0 0.0
    %1758 = vmatprep.subr.mxu0 0.0
    %1759 = vmatpush1.msra.mxu0 0.0
    %1760 = vmatprep.subr.mxu0 0.0
    %1761 = vmatpush1.msra.mxu0 0.0
    %1762 = vmatprep.subr.mxu0 0.0
    %1763 = vmatpush1.msra.mxu0 0.0
    %1764 = vmatprep.subr.mxu0 0.0
    %1765 = vmatpush1.msra.mxu0 0.0
    %1766 = vmatprep.subr.mxu0 0.0
    %1767 = vmatpush1.msra.mxu0 0.0
    %1768 = vmatprep.subr.mxu0 0.0
    %1769 = vmatpush1.msra.mxu0 0.0
    %1770 = vmatprep.subr.mxu0 0.0
    %1771 = vmatpush1.msra.mxu0 %v1273
    %1772 = vmatprep.subr.mxu0 0.0
    %1773 = vmatpush1.msra.mxu0 %v1272
    %1774 = vmatprep.subr.mxu0 0.0
    %1775 = vmatpush1.msra.mxu0 %v1271
    %1776 = vmatprep.subr.mxu0 0.0
    %1777 = vmatpush1.msra.mxu0 %v1270
    %1778 = vmatprep.subr.mxu0 0.0
    %1779 = vmatpush2.msra.mxu0 0.0
    %1780 = vmatprep.subr.mxu0 0.0
    %1781 = vmatpush2.msra.mxu0 0.0
    %1782 = vmatprep.subr.mxu0 0.0
    %1783 = vmatpush2.msra.mxu0 0.0
    %1784 = vmatprep.subr.mxu0 0.0
    %1785 = vmatpush2.msra.mxu0 0.0
    %1786 = vmatprep.subr.mxu0 0.0
    %1787 = vmatpush2.msra.mxu0 0.0
    %1788 = vmatprep.subr.mxu0 0.0
    %1789 = vmatpush2.msra.mxu0 0.0
    %1790 = vmatprep.subr.mxu0 0.0
    %1791 = vmatpush2.msra.mxu0 0.0
    %1792 = vmatprep.subr.mxu0 0.0
    %1793 = vmatpush2.msra.mxu0 0.0
    %1794 = vmatprep.subr.mxu0 0.0
    %1795 = vmatpush2.msra.mxu0 0.0
    %1796 = vmatprep.subr.mxu0 0.0
    %1797 = vmatpush2.msra.mxu0 0.0
    %1798 = vmatprep.subr.mxu0 0.0
    %1799 = vmatpush2.msra.mxu0 0.0
    %1800 = vmatprep.subr.mxu0 0.0
    %1801 = vmatpush2.msra.mxu0 0.0
    %1802 = vmatprep.subr.mxu0 0.0
    %1803 = vmatpush2.msra.mxu0 0.0
    %1804 = vmatprep.subr.mxu0 0.0
    %1805 = vmatpush2.msra.mxu0 0.0
    %1806 = vmatprep.subr.mxu0 0.0
    %1807 = vmatpush2.msra.mxu0 0.0
    %1808 = vmatprep.subr.mxu0 0.0
    %1809 = vmatpush2.msra.mxu0 0.0
    %1810 = vmatprep.mubr.f32.mxu0 0.0
    %1811 = vmatmul.mubr.f32.gmra.mxu0 %v1735
    %v1812 = vpop.f32.mrf.mxu0
    %v1813 = vadd.f32 %v1732, %v1812
    %v1814 = vpop.f32.mrf.mxu0
    %1815 = vmatprep.mubr.f32.mxu0 0.0
    %1816 = vmatmul.mubr.f32.gmra.mxu0 %v1738
    %v1817 = vpop.f32.mrf.mxu0
    %v1818 = vadd.f32 %v1732, %v1817
    %v1819 = vpop.f32.mrf.mxu0
    %1820 = vmatprep.mubr.f32.mxu0 0.0
    %1821 = vmatmul.mubr.f32.gmra.mxu0 %v1741
    %v1822 = vpop.f32.mrf.mxu0
    %v1823 = vadd.f32 %v1732, %v1822
    %v1824 = vpop.f32.mrf.mxu0
    %1825 = vmatprep.mubr.f32.mxu0 0.0
    %1826 = vmatmul.mubr.f32.gmra.mxu0 %v1744
    %v1827 = vpop.f32.mrf.mxu0
    %v1828 = vadd.f32 %v1732, %v1827
    %v1829 = vpop.f32.mrf.mxu0
    %1830 = vdwg.mxu0
    %v1831 = vmax.f32 %v1813, 0.0
    %v1832 = vmax.f32 %v1818, 0.0
    %v1833 = vmax.f32 %v1823, 0.0
    %v1834 = vmax.f32 %v1828, 0.0
    %s1835 = scalar_lea.vmem [#allocation2], 384
    %v1836 = vld [vmem:[%s1835] sm:$0xff]
    %v1837 = vld [vmem:[%s1835 + $0x8] sm:$0xff]
    %v1838 = vld [vmem:[%s1835 + $0x10] sm:$0xff]
    %v1839 = vld [vmem:[%s1835 + $0x18] sm:$0xff]
    %s1840 = scalar_lea.vmem [#allocation2], 416
    %v1841 = vld [vmem:[%s1840] sm:$0xff]
    %v1842 = vld [vmem:[%s1840 + $0x8] sm:$0xff]
    %v1843 = vld [vmem:[%s1840 + $0x10] sm:$0xff]
    %v1844 = vld [vmem:[%s1840 + $0x18] sm:$0xff]
    %s1845 = scalar_lea.vmem [#allocation2], 448
    %v1846 = vld [vmem:[%s1845] sm:$0xff]
    %v1847 = vld [vmem:[%s1845 + $0x8] sm:$0xff]
    %v1848 = vld [vmem:[%s1845 + $0x10] sm:$0xff]
    %v1849 = vld [vmem:[%s1845 + $0x18] sm:$0xff]
    %s1850 = scalar_lea.vmem [#allocation2], 480
    %v1851 = vld [vmem:[%s1850] sm:$0xff]
    %v1852 = vld [vmem:[%s1850 + $0x8] sm:$0xff]
    %v1853 = vld [vmem:[%s1850 + $0x10] sm:$0xff]
    %v1854 = vld [vmem:[%s1850 + $0x18] sm:$0xff]
    %s1855 = scalar_lea.vmem %s4, 12
    %v1856 = vld [vmem:[%s1855] sm:$0x1]
    %s1857 = scalar_lea.vmem %s4, 13
    %v1858 = vld [vmem:[%s1857] sm:$0x1]
    %s1859 = scalar_lea.vmem %s4, 14
    %v1860 = vld [vmem:[%s1859] sm:$0x1]
    %s1861 = scalar_lea.vmem %s4, 15
    %v1862 = vld [vmem:[%s1861] sm:$0x1]
    %v1864 = vlaneseq
    %v1865 = vshrl.u32 %v1864, 7
    %v1866 = vsub.s32 0, %v1865
    %v1867 = vrot.slane %v1856, %v1866
    %v1870 = vsel %vm94, %v1831, 0
    %v1873 = vsel %vm94, %v1832, 0
    %v1876 = vsel %vm94, %v1833, 0
    %v1879 = vsel %vm94, %v1834, 0
    %1881 = vmatprep.subr.mxu0 0.0
    %1882 = vmatpush1.msra.mxu0 0.0
    %1883 = vmatprep.subr.mxu0 0.0
    %1884 = vmatpush1.msra.mxu0 0.0
    %1885 = vmatprep.subr.mxu0 0.0
    %1886 = vmatpush1.msra.mxu0 0.0
    %1887 = vmatprep.subr.mxu0 0.0
    %1888 = vmatpush1.msra.mxu0 0.0
    %1889 = vmatprep.subr.mxu0 0.0
    %1890 = vmatpush1.msra.mxu0 0.0
    %1891 = vmatprep.subr.mxu0 0.0
    %1892 = vmatpush1.msra.mxu0 0.0
    %1893 = vmatprep.subr.mxu0 0.0
    %1894 = vmatpush1.msra.mxu0 0.0
    %1895 = vmatprep.subr.mxu0 0.0
    %1896 = vmatpush1.msra.mxu0 0.0
    %1897 = vmatprep.subr.mxu0 0.0
    %1898 = vmatpush1.msra.mxu0 0.0
    %1899 = vmatprep.subr.mxu0 0.0
    %1900 = vmatpush1.msra.mxu0 0.0
    %1901 = vmatprep.subr.mxu0 0.0
    %1902 = vmatpush1.msra.mxu0 0.0
    %1903 = vmatprep.subr.mxu0 0.0
    %1904 = vmatpush1.msra.mxu0 0.0
    %1905 = vmatprep.subr.mxu0 0.0
    %1906 = vmatpush1.msra.mxu0 %v1839
    %1907 = vmatprep.subr.mxu0 0.0
    %1908 = vmatpush1.msra.mxu0 %v1838
    %1909 = vmatprep.subr.mxu0 0.0
    %1910 = vmatpush1.msra.mxu0 %v1837
    %1911 = vmatprep.subr.mxu0 0.0
    %1912 = vmatpush1.msra.mxu0 %v1836
    %1913 = vmatprep.subr.mxu0 0.0
    %1914 = vmatpush2.msra.mxu0 0.0
    %1915 = vmatprep.subr.mxu0 0.0
    %1916 = vmatpush2.msra.mxu0 0.0
    %1917 = vmatprep.subr.mxu0 0.0
    %1918 = vmatpush2.msra.mxu0 0.0
    %1919 = vmatprep.subr.mxu0 0.0
    %1920 = vmatpush2.msra.mxu0 0.0
    %1921 = vmatprep.subr.mxu0 0.0
    %1922 = vmatpush2.msra.mxu0 0.0
    %1923 = vmatprep.subr.mxu0 0.0
    %1924 = vmatpush2.msra.mxu0 0.0
    %1925 = vmatprep.subr.mxu0 0.0
    %1926 = vmatpush2.msra.mxu0 0.0
    %1927 = vmatprep.subr.mxu0 0.0
    %1928 = vmatpush2.msra.mxu0 0.0
    %1929 = vmatprep.subr.mxu0 0.0
    %1930 = vmatpush2.msra.mxu0 0.0
    %1931 = vmatprep.subr.mxu0 0.0
    %1932 = vmatpush2.msra.mxu0 0.0
    %1933 = vmatprep.subr.mxu0 0.0
    %1934 = vmatpush2.msra.mxu0 0.0
    %1935 = vmatprep.subr.mxu0 0.0
    %1936 = vmatpush2.msra.mxu0 0.0
    %1937 = vmatprep.subr.mxu0 0.0
    %1938 = vmatpush2.msra.mxu0 0.0
    %1939 = vmatprep.subr.mxu0 0.0
    %1940 = vmatpush2.msra.mxu0 0.0
    %1941 = vmatprep.subr.mxu0 0.0
    %1942 = vmatpush2.msra.mxu0 0.0
    %1943 = vmatprep.subr.mxu0 0.0
    %1944 = vmatpush2.msra.mxu0 0.0
    %1945 = vmatprep.mubr.f32.mxu0 0.0
    %1946 = vmatmul.mubr.f32.gmra.mxu0 %v1870
    %v1947 = vpop.f32.mrf.mxu0
    %v1948 = vadd.f32 %v1867, %v1947
    %v1949 = vpop.f32.mrf.mxu0
    %1950 = vmatprep.mubr.f32.mxu0 0.0
    %1951 = vmatmul.mubr.f32.gmra.mxu0 %v1873
    %v1952 = vpop.f32.mrf.mxu0
    %v1953 = vadd.f32 %v1867, %v1952
    %v1954 = vpop.f32.mrf.mxu0
    %1955 = vmatprep.mubr.f32.mxu0 0.0
    %1956 = vmatmul.mubr.f32.gmra.mxu0 %v1876
    %v1957 = vpop.f32.mrf.mxu0
    %v1958 = vadd.f32 %v1867, %v1957
    %v1959 = vpop.f32.mrf.mxu0
    %1960 = vmatprep.mubr.f32.mxu0 0.0
    %1961 = vmatmul.mubr.f32.gmra.mxu0 %v1879
    %v1962 = vpop.f32.mrf.mxu0
    %v1963 = vadd.f32 %v1867, %v1962
    %v1964 = vpop.f32.mrf.mxu0
    %1965 = vdwg.mxu0
    %v1966 = vmax.f32 %v1948, 0.0
    %v1967 = vmax.f32 %v1953, 0.0
    %v1968 = vmax.f32 %v1958, 0.0
    %v1969 = vmax.f32 %v1963, 0.0
    %v1971 = vlaneseq
    %v1972 = vshrl.u32 %v1971, 7
    %v1973 = vsub.s32 0, %v1972
    %v1974 = vrot.slane %v1858, %v1973
    %v1977 = vsel %vm94, %v1966, 0
    %v1980 = vsel %vm94, %v1967, 0
    %v1983 = vsel %vm94, %v1968, 0
    %v1986 = vsel %vm94, %v1969, 0
    %1988 = vmatprep.subr.mxu0 0.0
    %1989 = vmatpush1.msra.mxu0 0.0
    %1990 = vmatprep.subr.mxu0 0.0
    %1991 = vmatpush1.msra.mxu0 0.0
    %1992 = vmatprep.subr.mxu0 0.0
    %1993 = vmatpush1.msra.mxu0 0.0
    %1994 = vmatprep.subr.mxu0 0.0
    %1995 = vmatpush1.msra.mxu0 0.0
    %1996 = vmatprep.subr.mxu0 0.0
    %1997 = vmatpush1.msra.mxu0 0.0
    %1998 = vmatprep.subr.mxu0 0.0
    %1999 = vmatpush1.msra.mxu0 0.0
    %2000 = vmatprep.subr.mxu0 0.0
    %2001 = vmatpush1.msra.mxu0 0.0
    %2002 = vmatprep.subr.mxu0 0.0
    %2003 = vmatpush1.msra.mxu0 0.0
    %2004 = vmatprep.subr.mxu0 0.0
    %2005 = vmatpush1.msra.mxu0 0.0
    %2006 = vmatprep.subr.mxu0 0.0
    %2007 = vmatpush1.msra.mxu0 0.0
    %2008 = vmatprep.subr.mxu0 0.0
    %2009 = vmatpush1.msra.mxu0 0.0
    %2010 = vmatprep.subr.mxu0 0.0
    %2011 = vmatpush1.msra.mxu0 0.0
    %2012 = vmatprep.subr.mxu0 0.0
    %2013 = vmatpush1.msra.mxu0 %v1844
    %2014 = vmatprep.subr.mxu0 0.0
    %2015 = vmatpush1.msra.mxu0 %v1843
    %2016 = vmatprep.subr.mxu0 0.0
    %2017 = vmatpush1.msra.mxu0 %v1842
    %2018 = vmatprep.subr.mxu0 0.0
    %2019 = vmatpush1.msra.mxu0 %v1841
    %2020 = vmatprep.subr.mxu0 0.0
    %2021 = vmatpush2.msra.mxu0 0.0
    %2022 = vmatprep.subr.mxu0 0.0
    %2023 = vmatpush2.msra.mxu0 0.0
    %2024 = vmatprep.subr.mxu0 0.0
    %2025 = vmatpush2.msra.mxu0 0.0
    %2026 = vmatprep.subr.mxu0 0.0
    %2027 = vmatpush2.msra.mxu0 0.0
    %2028 = vmatprep.subr.mxu0 0.0
    %2029 = vmatpush2.msra.mxu0 0.0
    %2030 = vmatprep.subr.mxu0 0.0
    %2031 = vmatpush2.msra.mxu0 0.0
    %2032 = vmatprep.subr.mxu0 0.0
    %2033 = vmatpush2.msra.mxu0 0.0
    %2034 = vmatprep.subr.mxu0 0.0
    %2035 = vmatpush2.msra.mxu0 0.0
    %2036 = vmatprep.subr.mxu0 0.0
    %2037 = vmatpush2.msra.mxu0 0.0
    %2038 = vmatprep.subr.mxu0 0.0
    %2039 = vmatpush2.msra.mxu0 0.0
    %2040 = vmatprep.subr.mxu0 0.0
    %2041 = vmatpush2.msra.mxu0 0.0
    %2042 = vmatprep.subr.mxu0 0.0
    %2043 = vmatpush2.msra.mxu0 0.0
    %2044 = vmatprep.subr.mxu0 0.0
    %2045 = vmatpush2.msra.mxu0 0.0
    %2046 = vmatprep.subr.mxu0 0.0
    %2047 = vmatpush2.msra.mxu0 0.0
    %2048 = vmatprep.subr.mxu0 0.0
    %2049 = vmatpush2.msra.mxu0 0.0
    %2050 = vmatprep.subr.mxu0 0.0
    %2051 = vmatpush2.msra.mxu0 0.0
    %2052 = vmatprep.mubr.f32.mxu0 0.0
    %2053 = vmatmul.mubr.f32.gmra.mxu0 %v1977
    %v2054 = vpop.f32.mrf.mxu0
    %v2055 = vadd.f32 %v1974, %v2054
    %v2056 = vpop.f32.mrf.mxu0
    %2057 = vmatprep.mubr.f32.mxu0 0.0
    %2058 = vmatmul.mubr.f32.gmra.mxu0 %v1980
    %v2059 = vpop.f32.mrf.mxu0
    %v2060 = vadd.f32 %v1974, %v2059
    %v2061 = vpop.f32.mrf.mxu0
    %2062 = vmatprep.mubr.f32.mxu0 0.0
    %2063 = vmatmul.mubr.f32.gmra.mxu0 %v1983
    %v2064 = vpop.f32.mrf.mxu0
    %v2065 = vadd.f32 %v1974, %v2064
    %v2066 = vpop.f32.mrf.mxu0
    %2067 = vmatprep.mubr.f32.mxu0 0.0
    %2068 = vmatmul.mubr.f32.gmra.mxu0 %v1986
    %v2069 = vpop.f32.mrf.mxu0
    %v2070 = vadd.f32 %v1974, %v2069
    %v2071 = vpop.f32.mrf.mxu0
    %2072 = vdwg.mxu0
    %v2073 = vmax.f32 %v2055, 0.0
    %v2074 = vmax.f32 %v2060, 0.0
    %v2075 = vmax.f32 %v2065, 0.0
    %v2076 = vmax.f32 %v2070, 0.0
    %v2078 = vsel %vm94, %v2073, 0
    %v2081 = vsel %vm94, %v2074, 0
    %v2084 = vsel %vm94, %v2075, 0
    %v2087 = vsel %vm94, %v2076, 0
    %2089 = vmatprep.subr.mxu0 0.0
    %2090 = vmatpush1.msra.mxu0 0.0
    %2091 = vmatprep.subr.mxu0 0.0
    %2092 = vmatpush1.msra.mxu0 0.0
    %2093 = vmatprep.subr.mxu0 0.0
    %2094 = vmatpush1.msra.mxu0 0.0
    %2095 = vmatprep.subr.mxu0 0.0
    %2096 = vmatpush1.msra.mxu0 0.0
    %2097 = vmatprep.subr.mxu0 0.0
    %2098 = vmatpush1.msra.mxu0 0.0
    %2099 = vmatprep.subr.mxu0 0.0
    %2100 = vmatpush1.msra.mxu0 0.0
    %2101 = vmatprep.subr.mxu0 0.0
    %2102 = vmatpush1.msra.mxu0 0.0
    %2103 = vmatprep.subr.mxu0 0.0
    %2104 = vmatpush1.msra.mxu0 0.0
    %2105 = vmatprep.subr.mxu0 0.0
    %2106 = vmatpush1.msra.mxu0 0.0
    %2107 = vmatprep.subr.mxu0 0.0
    %2108 = vmatpush1.msra.mxu0 0.0
    %2109 = vmatprep.subr.mxu0 0.0
    %2110 = vmatpush1.msra.mxu0 0.0
    %2111 = vmatprep.subr.mxu0 0.0
    %2112 = vmatpush1.msra.mxu0 0.0
    %2113 = vmatprep.subr.mxu0 0.0
    %2114 = vmatpush1.msra.mxu0 %v1849
    %2115 = vmatprep.subr.mxu0 0.0
    %2116 = vmatpush1.msra.mxu0 %v1848
    %2117 = vmatprep.subr.mxu0 0.0
    %2118 = vmatpush1.msra.mxu0 %v1847
    %2119 = vmatprep.subr.mxu0 0.0
    %2120 = vmatpush1.msra.mxu0 %v1846
    %2121 = vmatprep.subr.mxu0 0.0
    %2122 = vmatpush2.msra.mxu0 0.0
    %2123 = vmatprep.subr.mxu0 0.0
    %2124 = vmatpush2.msra.mxu0 0.0
    %2125 = vmatprep.subr.mxu0 0.0
    %2126 = vmatpush2.msra.mxu0 0.0
    %2127 = vmatprep.subr.mxu0 0.0
    %2128 = vmatpush2.msra.mxu0 0.0
    %2129 = vmatprep.subr.mxu0 0.0
    %2130 = vmatpush2.msra.mxu0 0.0
    %2131 = vmatprep.subr.mxu0 0.0
    %2132 = vmatpush2.msra.mxu0 0.0
    %2133 = vmatprep.subr.mxu0 0.0
    %2134 = vmatpush2.msra.mxu0 0.0
    %2135 = vmatprep.subr.mxu0 0.0
    %2136 = vmatpush2.msra.mxu0 0.0
    %2137 = vmatprep.subr.mxu0 0.0
    %2138 = vmatpush2.msra.mxu0 0.0
    %2139 = vmatprep.subr.mxu0 0.0
    %2140 = vmatpush2.msra.mxu0 0.0
    %2141 = vmatprep.subr.mxu0 0.0
    %2142 = vmatpush2.msra.mxu0 0.0
    %2143 = vmatprep.subr.mxu0 0.0
    %2144 = vmatpush2.msra.mxu0 0.0
    %2145 = vmatprep.subr.mxu0 0.0
    %2146 = vmatpush2.msra.mxu0 0.0
    %2147 = vmatprep.subr.mxu0 0.0
    %2148 = vmatpush2.msra.mxu0 0.0
    %2149 = vmatprep.subr.mxu0 0.0
    %2150 = vmatpush2.msra.mxu0 0.0
    %2151 = vmatprep.subr.mxu0 0.0
    %2152 = vmatpush2.msra.mxu0 0.0
    %2153 = vmatprep.mubr.f32.mxu0 0.0
    %2154 = vmatmul.mubr.f32.gmra.mxu0 %v2078
    %v2155 = vpop.f32.mrf.mxu0
    %v2156 = vadd.f32 0.0, %v2155
    %v2157 = vpop.f32.mrf.mxu0
    %2158 = vmatprep.mubr.f32.mxu0 0.0
    %2159 = vmatmul.mubr.f32.gmra.mxu0 %v2081
    %v2160 = vpop.f32.mrf.mxu0
    %v2161 = vadd.f32 0.0, %v2160
    %v2162 = vpop.f32.mrf.mxu0
    %2163 = vmatprep.mubr.f32.mxu0 0.0
    %2164 = vmatmul.mubr.f32.gmra.mxu0 %v2084
    %v2165 = vpop.f32.mrf.mxu0
    %v2166 = vadd.f32 0.0, %v2165
    %v2167 = vpop.f32.mrf.mxu0
    %2168 = vmatprep.mubr.f32.mxu0 0.0
    %2169 = vmatmul.mubr.f32.gmra.mxu0 %v2087
    %v2170 = vpop.f32.mrf.mxu0
    %v2171 = vadd.f32 0.0, %v2170
    %v2172 = vpop.f32.mrf.mxu0
    %2173 = vdwg.mxu0
    %v2174 = vpack.c.bf16 %v2161, %v2156
    %v2175 = vpack.c.bf16 %v2171, %v2166
    %v2177 = vlaneseq
    %v2178 = vshrl.u32 %v2177, 7
    %v2179 = vsub.s32 0, %v2178
    %v2180 = vrot.slane %v1860, %v2179
    %2182 = vmatprep.subr.bf16.mxu0 0
    %2183 = vmatpush1.bf16.msra.mxu0 0
    %2184 = vmatprep.subr.bf16.mxu0 0
    %2185 = vmatpush1.bf16.msra.mxu0 0
    %2186 = vmatprep.subr.bf16.mxu0 0
    %2187 = vmatpush1.bf16.msra.mxu0 0
    %2188 = vmatprep.subr.bf16.mxu0 0
    %2189 = vmatpush1.bf16.msra.mxu0 0
    %2190 = vmatprep.subr.bf16.mxu0 0
    %2191 = vmatpush1.bf16.msra.mxu0 0
    %2192 = vmatprep.subr.bf16.mxu0 0
    %2193 = vmatpush1.bf16.msra.mxu0 0
    %2194 = vmatprep.subr.bf16.mxu0 0
    %2195 = vmatpush1.bf16.msra.mxu0 %v2175
    %2196 = vmatprep.subr.bf16.mxu0 0
    %2197 = vmatpush1.bf16.msra.mxu0 %v2174
    %2198 = vmatprep.subr.bf16.mxu0 0
    %2199 = vmatpush2.bf16.msra.mxu0 0
    %2200 = vmatprep.subr.bf16.mxu0 0
    %2201 = vmatpush2.bf16.msra.mxu0 0
    %2202 = vmatprep.subr.bf16.mxu0 0
    %2203 = vmatpush2.bf16.msra.mxu0 0
    %2204 = vmatprep.subr.bf16.mxu0 0
    %2205 = vmatpush2.bf16.msra.mxu0 0
    %2206 = vmatprep.subr.bf16.mxu0 0
    %2207 = vmatpush2.bf16.msra.mxu0 0
    %2208 = vmatprep.subr.bf16.mxu0 0
    %2209 = vmatpush2.bf16.msra.mxu0 0
    %2210 = vmatprep.subr.bf16.mxu0 0
    %2211 = vmatpush2.bf16.msra.mxu0 0
    %2212 = vmatprep.subr.bf16.mxu0 0
    %2213 = vmatpush2.bf16.msra.mxu0 0
    %2214 = vmatprep.mubr.bf16.mxu0 0
    %2215 = vmatmul.mubr.bf16.gmra.mxu0 %v1027
    %v2216 = vpop.f32.mrf.mxu0
    %v2217 = vadd.f32 %v2180, %v2216
    %v2218 = vpop.f32.mrf.mxu0
    %v2219 = vpop.f32.mrf.mxu0
    %v2220 = vadd.f32 %v2180, %v2219
    %v2221 = vpop.f32.mrf.mxu0
    %2222 = vmatprep.mubr.bf16.mxu0 0
    %2223 = vmatmul.mubr.bf16.gmra.mxu0 %v1030
    %v2224 = vpop.f32.mrf.mxu0
    %v2225 = vadd.f32 %v2180, %v2224
    %v2226 = vpop.f32.mrf.mxu0
    %v2227 = vpop.f32.mrf.mxu0
    %v2228 = vadd.f32 %v2180, %v2227
    %v2229 = vpop.f32.mrf.mxu0
    %2230 = vmatprep.mubr.bf16.mxu0 0
    %2231 = vmatmul.mubr.bf16.gmra.mxu0 %v1033
    %v2232 = vpop.f32.mrf.mxu0
    %v2233 = vadd.f32 %v2180, %v2232
    %v2234 = vpop.f32.mrf.mxu0
    %v2235 = vpop.f32.mrf.mxu0
    %v2236 = vadd.f32 %v2180, %v2235
    %v2237 = vpop.f32.mrf.mxu0
    %2238 = vmatprep.mubr.bf16.mxu0 0
    %2239 = vmatmul.mubr.bf16.gmra.mxu0 %v1036
    %v2240 = vpop.f32.mrf.mxu0
    %v2241 = vadd.f32 %v2180, %v2240
    %v2242 = vpop.f32.mrf.mxu0
    %v2243 = vpop.f32.mrf.mxu0
    %v2244 = vadd.f32 %v2180, %v2243
    %v2245 = vpop.f32.mrf.mxu0
    %2246 = vdwg.mxu0
    %v2247 = vmax.f32 %v2217, 0.0
    %v2248 = vmax.f32 %v2220, 0.0
    %v2249 = vmax.f32 %v2225, 0.0
    %v2250 = vmax.f32 %v2228, 0.0
    %v2251 = vmax.f32 %v2233, 0.0
    %v2252 = vmax.f32 %v2236, 0.0
    %v2253 = vmax.f32 %v2241, 0.0
    %v2254 = vmax.f32 %v2244, 0.0
    %v2256 = vlaneseq
    %v2257 = vshrl.u32 %v2256, 7
    %v2258 = vsub.s32 0, %v2257
    %v2259 = vrot.slane %v1862, %v2258
    %v2262 = vsel %vm94, %v2247, 0
    %v2265 = vsel %vm94, %v2248, 0
    %v2268 = vsel %vm94, %v2249, 0
    %v2271 = vsel %vm94, %v2250, 0
    %v2274 = vsel %vm94, %v2251, 0
    %v2277 = vsel %vm94, %v2252, 0
    %v2280 = vsel %vm94, %v2253, 0
    %v2283 = vsel %vm94, %v2254, 0
    %2285 = vmatprep.subr.mxu0 0.0
    %2286 = vmatpush1.msra.mxu0 0.0
    %2287 = vmatprep.subr.mxu0 0.0
    %2288 = vmatpush1.msra.mxu0 0.0
    %2289 = vmatprep.subr.mxu0 0.0
    %2290 = vmatpush1.msra.mxu0 0.0
    %2291 = vmatprep.subr.mxu0 0.0
    %2292 = vmatpush1.msra.mxu0 0.0
    %2293 = vmatprep.subr.mxu0 0.0
    %2294 = vmatpush1.msra.mxu0 0.0
    %2295 = vmatprep.subr.mxu0 0.0
    %2296 = vmatpush1.msra.mxu0 0.0
    %2297 = vmatprep.subr.mxu0 0.0
    %2298 = vmatpush1.msra.mxu0 0.0
    %2299 = vmatprep.subr.mxu0 0.0
    %2300 = vmatpush1.msra.mxu0 0.0
    %2301 = vmatprep.subr.mxu0 0.0
    %2302 = vmatpush1.msra.mxu0 0.0
    %2303 = vmatprep.subr.mxu0 0.0
    %2304 = vmatpush1.msra.mxu0 0.0
    %2305 = vmatprep.subr.mxu0 0.0
    %2306 = vmatpush1.msra.mxu0 0.0
    %2307 = vmatprep.subr.mxu0 0.0
    %2308 = vmatpush1.msra.mxu0 0.0
    %2309 = vmatprep.subr.mxu0 0.0
    %2310 = vmatpush1.msra.mxu0 %v1854
    %2311 = vmatprep.subr.mxu0 0.0
    %2312 = vmatpush1.msra.mxu0 %v1853
    %2313 = vmatprep.subr.mxu0 0.0
    %2314 = vmatpush1.msra.mxu0 %v1852
    %2315 = vmatprep.subr.mxu0 0.0
    %2316 = vmatpush1.msra.mxu0 %v1851
    %2317 = vmatprep.subr.mxu0 0.0
    %2318 = vmatpush2.msra.mxu0 0.0
    %2319 = vmatprep.subr.mxu0 0.0
    %2320 = vmatpush2.msra.mxu0 0.0
    %2321 = vmatprep.subr.mxu0 0.0
    %2322 = vmatpush2.msra.mxu0 0.0
    %2323 = vmatprep.subr.mxu0 0.0
    %2324 = vmatpush2.msra.mxu0 0.0
    %2325 = vmatprep.subr.mxu0 0.0
    %2326 = vmatpush2.msra.mxu0 0.0
    %2327 = vmatprep.subr.mxu0 0.0
    %2328 = vmatpush2.msra.mxu0 0.0
    %2329 = vmatprep.subr.mxu0 0.0
    %2330 = vmatpush2.msra.mxu0 0.0
    %2331 = vmatprep.subr.mxu0 0.0
    %2332 = vmatpush2.msra.mxu0 0.0
    %2333 = vmatprep.subr.mxu0 0.0
    %2334 = vmatpush2.msra.mxu0 0.0
    %2335 = vmatprep.subr.mxu0 0.0
    %2336 = vmatpush2.msra.mxu0 0.0
    %2337 = vmatprep.subr.mxu0 0.0
    %2338 = vmatpush2.msra.mxu0 0.0
    %2339 = vmatprep.subr.mxu0 0.0
    %2340 = vmatpush2.msra.mxu0 0.0
    %2341 = vmatprep.subr.mxu0 0.0
    %2342 = vmatpush2.msra.mxu0 0.0
    %2343 = vmatprep.subr.mxu0 0.0
    %2344 = vmatpush2.msra.mxu0 0.0
    %2345 = vmatprep.subr.mxu0 0.0
    %2346 = vmatpush2.msra.mxu0 0.0
    %2347 = vmatprep.subr.mxu0 0.0
    %2348 = vmatpush2.msra.mxu0 0.0
    %2349 = vmatprep.mubr.f32.mxu0 0.0
    %2350 = vmatmul.mubr.f32.gmra.mxu0 %v2262
    %v2351 = vpop.f32.mrf.mxu0
    %v2352 = vadd.f32 %v2259, %v2351
    %v2353 = vpop.f32.mrf.mxu0
    %2354 = vmatprep.mubr.f32.mxu0 0.0
    %2355 = vmatmul.mubr.f32.gmra.mxu0 %v2265
    %v2356 = vpop.f32.mrf.mxu0
    %v2357 = vadd.f32 %v2259, %v2356
    %v2358 = vpop.f32.mrf.mxu0
    %2359 = vmatprep.mubr.f32.mxu0 0.0
    %2360 = vmatmul.mubr.f32.gmra.mxu0 %v2268
    %v2361 = vpop.f32.mrf.mxu0
    %v2362 = vadd.f32 %v2259, %v2361
    %v2363 = vpop.f32.mrf.mxu0
    %2364 = vmatprep.mubr.f32.mxu0 0.0
    %2365 = vmatmul.mubr.f32.gmra.mxu0 %v2271
    %v2366 = vpop.f32.mrf.mxu0
    %v2367 = vadd.f32 %v2259, %v2366
    %v2368 = vpop.f32.mrf.mxu0
    %2369 = vmatprep.mubr.f32.mxu0 0.0
    %2370 = vmatmul.mubr.f32.gmra.mxu0 %v2274
    %v2371 = vpop.f32.mrf.mxu0
    %v2372 = vadd.f32 %v2259, %v2371
    %v2373 = vpop.f32.mrf.mxu0
    %2374 = vmatprep.mubr.f32.mxu0 0.0
    %2375 = vmatmul.mubr.f32.gmra.mxu0 %v2277
    %v2376 = vpop.f32.mrf.mxu0
    %v2377 = vadd.f32 %v2259, %v2376
    %v2378 = vpop.f32.mrf.mxu0
    %2379 = vmatprep.mubr.f32.mxu0 0.0
    %2380 = vmatmul.mubr.f32.gmra.mxu0 %v2280
    %v2381 = vpop.f32.mrf.mxu0
    %v2382 = vadd.f32 %v2259, %v2381
    %v2383 = vpop.f32.mrf.mxu0
    %2384 = vmatprep.mubr.f32.mxu0 0.0
    %2385 = vmatmul.mubr.f32.gmra.mxu0 %v2283
    %v2386 = vpop.f32.mrf.mxu0
    %v2387 = vadd.f32 %v2259, %v2386
    %v2388 = vpop.f32.mrf.mxu0
    %2389 = vdwg.mxu0
    %v2390 = vmax.f32 %v2352, 0.0
    %v2391 = vmax.f32 %v2357, 0.0
    %v2392 = vmax.f32 %v2362, 0.0
    %v2393 = vmax.f32 %v2367, 0.0
    %v2394 = vmax.f32 %v2372, 0.0
    %v2395 = vmax.f32 %v2377, 0.0
    %v2396 = vmax.f32 %v2382, 0.0
    %v2397 = vmax.f32 %v2387, 0.0
    %v2398 = vsel %vm94, %v2390, -inf
    %v2399 = vsel %vm94, %v2391, -inf
    %v2400 = vsel %vm94, %v2392, -inf
    %v2401 = vsel %vm94, %v2393, -inf
    %v2402 = vsel %vm94, %v2394, -inf
    %v2403 = vmax.f32 %v2398, %v2402
    %v2404 = vsel %vm94, %v2395, -inf
    %v2405 = vmax.f32 %v2399, %v2404
    %v2406 = vsel %vm94, %v2396, -inf
    %v2407 = vmax.f32 %v2400, %v2406
    %v2408 = vsel %vm94, %v2397, -inf
    %v2409 = vmax.f32 %v2401, %v2408
    %v2410 = vmax.f32 %v2403, %v2405
    %v2411 = vmax.f32 %v2407, %v2409
    %v2412 = vmax.f32 %v2410, %v2411
    %v2413 = vrot.slane %v2412, 4
    %v2414 = vmax.f32 %v2412, %v2413
    %v2415 = vrot.slane %v2414, 2
    %v2416 = vmax.f32 %v2414, %v2415
    %v2417 = vrot.slane %v2416, 1
    %v2418 = vmax.f32 %v2416, %v2417
    %v2419 = vld [vmem:[%s5] sm:$0xff]
    %v2420 = vld [vmem:[%s5 + $0x8] sm:$0xff]
    %v2421 = vld [vmem:[%s5 + $0x10] sm:$0xff]
    %v2422 = vld [vmem:[%s5 + $0x18] sm:$0xff]
    %v2423 = vld [vmem:[%s6] sm:$0x1]
    %v2425 = vsel %vm94, %v2418, 0
    %2427 = vmatprep.subr.mxu0 0.0
    %2428 = vmatpush1.msra.mxu0 0.0
    %2429 = vmatprep.subr.mxu0 0.0
    %2430 = vmatpush1.msra.mxu0 0.0
    %2431 = vmatprep.subr.mxu0 0.0
    %2432 = vmatpush1.msra.mxu0 0.0
    %2433 = vmatprep.subr.mxu0 0.0
    %2434 = vmatpush1.msra.mxu0 0.0
    %2435 = vmatprep.subr.mxu0 0.0
    %2436 = vmatpush1.msra.mxu0 0.0
    %2437 = vmatprep.subr.mxu0 0.0
    %2438 = vmatpush1.msra.mxu0 0.0
    %2439 = vmatprep.subr.mxu0 0.0
    %2440 = vmatpush1.msra.mxu0 0.0
    %2441 = vmatprep.subr.mxu0 0.0
    %2442 = vmatpush1.msra.mxu0 0.0
    %2443 = vmatprep.subr.mxu0 0.0
    %2444 = vmatpush1.msra.mxu0 0.0
    %2445 = vmatprep.subr.mxu0 0.0
    %2446 = vmatpush1.msra.mxu0 0.0
    %2447 = vmatprep.subr.mxu0 0.0
    %2448 = vmatpush1.msra.mxu0 0.0
    %2449 = vmatprep.subr.mxu0 0.0
    %2450 = vmatpush1.msra.mxu0 0.0
    %2451 = vmatprep.subr.mxu0 0.0
    %2452 = vmatpush1.msra.mxu0 %v2422
    %2453 = vmatprep.subr.mxu0 0.0
    %2454 = vmatpush1.msra.mxu0 %v2421
    %2455 = vmatprep.subr.mxu0 0.0
    %2456 = vmatpush1.msra.mxu0 %v2420
    %2457 = vmatprep.subr.mxu0 0.0
    %2458 = vmatpush1.msra.mxu0 %v2419
    %2459 = vmatprep.subr.mxu0 0.0
    %2460 = vmatpush2.msra.mxu0 0.0
    %2461 = vmatprep.subr.mxu0 0.0
    %2462 = vmatpush2.msra.mxu0 0.0
    %2463 = vmatprep.subr.mxu0 0.0
    %2464 = vmatpush2.msra.mxu0 0.0
    %2465 = vmatprep.subr.mxu0 0.0
    %2466 = vmatpush2.msra.mxu0 0.0
    %2467 = vmatprep.subr.mxu0 0.0
    %2468 = vmatpush2.msra.mxu0 0.0
    %2469 = vmatprep.subr.mxu0 0.0
    %2470 = vmatpush2.msra.mxu0 0.0
    %2471 = vmatprep.subr.mxu0 0.0
    %2472 = vmatpush2.msra.mxu0 0.0
    %2473 = vmatprep.subr.mxu0 0.0
    %2474 = vmatpush2.msra.mxu0 0.0
    %2475 = vmatprep.subr.mxu0 0.0
    %2476 = vmatpush2.msra.mxu0 0.0
    %2477 = vmatprep.subr.mxu0 0.0
    %2478 = vmatpush2.msra.mxu0 0.0
    %2479 = vmatprep.subr.mxu0 0.0
    %2480 = vmatpush2.msra.mxu0 0.0
    %2481 = vmatprep.subr.mxu0 0.0
    %2482 = vmatpush2.msra.mxu0 0.0
    %2483 = vmatprep.subr.mxu0 0.0
    %2484 = vmatpush2.msra.mxu0 0.0
    %2485 = vmatprep.subr.mxu0 0.0
    %2486 = vmatpush2.msra.mxu0 0.0
    %2487 = vmatprep.subr.mxu0 0.0
    %2488 = vmatpush2.msra.mxu0 0.0
    %2489 = vmatprep.subr.mxu0 0.0
    %2490 = vmatpush2.msra.mxu0 0.0
    %2491 = vmatprep.mubr.f32.mxu0 0.0
    %2492 = vmatmul.mubr.f32.gmra.mxu0 %v2425
    %v2493 = vpop.f32.mrf.mxu0
    %v2494 = vadd.f32 %v2423, %v2493
    %v2495 = vpop.f32.mrf.mxu0
    %2496 = vdwg.mxu0
    %v2497 = vxor.u32 %v2494, 2147483648
    %v2498 = vmul.f32 %v2497, 1.442695
    %v2499 = vpow.pop %v2498
    %v2500 = vadd.f32 %v2499, 1.0
    %v2501 = vrcp.pop %v2500
    %v2502 = vmul.f32 1.0, %v2501
    %vm2503 = vcmask 57344
    %2504 = vst.msk [vmem:[#allocation5] sm:$0x1] %vm2503, %v2502
    // Predicated region
    $region34: #{tpu_custom_call.1} parent=1 // pred_check
      _
    $region35: #{tpu_custom_call.1} parent=1 // pred_check_branch
      %2506 = sbr.rel (0) target = $region37
    $region36: #{tpu_custom_call.1} parent=1 // pred_region
      %s2508 = ssub.s32 16, 16
      %2509 = vsyncadd [#allocation4], %s2508
      %s2511 = sshll.u32 [#allocation5], 4
      %s2512 = int_to_ptr.vmem [resolvable:$true] %s2511
      %2514 = dma.vmem_to_hbm [thread:$0]  %s2512, 16, %s7, [#allocation4]
    $region37: #{tpu_custom_call.1} parent=1 // pred_fallthru
      _
    // Predicated region
    $region38: #{tpu_custom_call.1} parent=1 // pred_check
      _
    $region39: #{tpu_custom_call.1} parent=1 // pred_check_branch
      %2516 = sbr.rel (0) target = $region41
    $region40: #{tpu_custom_call.1} parent=1 // pred_region
      %2517 = dma.done [#allocation4], 16
    $region41: #{tpu_custom_call.1} parent=1 // pred_fallthru
      _
    %2518 = vsyncpa [#allocation3], 1
    %2519 = vsyncpa [#allocation4], 1

</llo_original>
